<compile_context>
chip_gen: v6e
topology: v6e:2x2x1
jax: 0.10.0
libtpu: 0.0.40
codegen_flags: <defaults>
</compile_context>

<pallas_src>
import functools

import jax
import jax.numpy as jnp
from jax.experimental import pallas as pl
from jax.experimental.pallas import tpu as pltpu


# ----------------------------- Pallas kernels ------------------------------

def _layernorm(x, g, b, eps):
    mean = jnp.mean(x, axis=-1, keepdims=True)
    var = jnp.mean((x - mean) ** 2, axis=-1, keepdims=True)
    return (x - mean) * jax.lax.rsqrt(var + eps) * g + b


def _frontend_kernel(p1_ref, w1_ref, b1_ref, s2_ref, w2_ref, b2_ref,
                     s3_ref, w3_ref, b3_ref, lng_ref, lnb_ref, fpw_ref, fpb_ref,
                     o_ref, *, eps):
    """Fused feature extractor (3 strided convs + GELU) + feature projection (LN + Linear).

    One batch element per grid step.  Strided convs 2/3 are expressed as
        out = sum_tap (S_tap @ x) @ W_tap
    with tiny precomputed 0/1 selection matrices S_tap (MXU-friendly, no gathers/strided
    slices inside the kernel).
    """
    f32 = jnp.float32

    # conv1 (im2col patches computed host-side with cheap reshapes): [T1, 10] @ [10, H]
    x = jnp.dot(p1_ref[0], w1_ref[...], preferred_element_type=f32) + b1_ref[...]
    x = jax.nn.gelu(x, approximate=True)                                  # [T1, H]

    def conv_block(x, s_ref, w_ref, b_ref):
        k = s_ref.shape[0]
        t_out = s_ref.shape[1]
        h = w_ref.shape[2]
        y = jnp.zeros((t_out, h), f32)
        for tap in range(k):                                              # static unroll (k=3)
            xt = jnp.dot(s_ref[tap], x, preferred_element_type=f32)       # [t_out, t_in]@[t_in, H]
            y = y + jnp.dot(xt, w_ref[tap], preferred_element_type=f32)   # [t_out, H]@[H, H]
        return jax.nn.gelu(y + b_ref[...], approximate=True)

    x = conv_block(x, s2_ref, w2_ref, b2_ref)                             # [T2, H]
    x = conv_block(x, s3_ref, w3_ref, b3_ref)                             # [T3, H]

    # Feature projection: LayerNorm + Linear, fused.
    xn = _layernorm(x, lng_ref[...], lnb_ref[...], eps)
    h = jnp.dot(xn, fpw_ref[...], preferred_element_type=f32) + fpb_ref[...]
    o_ref[0] = h.astype(o_ref.dtype)


def _layer_kernel(h_ref, wqkv_ref, bqkv_ref, wo_ref, bo_ref,
                  ln1g_ref, ln1b_ref, w1_ref, b1_ref, w2_ref, b2_ref,
                  ln2g_ref, ln2b_ref, o_ref, *, n_heads, eps):
    """One whole transformer encoder layer (fused QKV + MHA + out-proj + LN + FFN + LN).

    One batch element per grid step; everything stays in VMEM / vregs.
    """
    f32 = jnp.float32
    h = h_ref[0].astype(f32)                                              # [T, H]
    T, H = h.shape
    dh = H // n_heads
    scale = 1.0 / float(dh) ** 0.5

    # Fused QKV projection: single [T, H] @ [H, 3H] MXU pass.
    qkv = jnp.dot(h, wqkv_ref[...], preferred_element_type=f32) + bqkv_ref[...]   # [T, 3H]
    wo = wo_ref[...]                                                      # [H, H]

    # Multi-head attention, all heads inside this kernel; the per-head output is folded
    # directly into the output projection (accumulate o_h @ Wo[h*dh:(h+1)*dh]) so no concat
    # and the running result stays a lane-dense [T, H] slab.
    attn_o = jnp.zeros((T, H), f32)
    for hd in range(n_heads):                                             # static unroll
        q = qkv[:, hd * dh:(hd + 1) * dh]
        k = qkv[:, H + hd * dh:H + (hd + 1) * dh]
        v = qkv[:, 2 * H + hd * dh:2 * H + (hd + 1) * dh]
        s = jax.lax.dot_general(q, k, (((1,), (1,)), ((), ())),
                                preferred_element_type=f32) * scale       # [T, T]
        s = s - jnp.max(s, axis=-1, keepdims=True)
        p = jnp.exp(s)
        p = p * pl.reciprocal(jnp.sum(p, axis=-1, keepdims=True), approx=True)
        oh = jnp.dot(p, v, preferred_element_type=f32)                    # [T, dh]
        attn_o = attn_o + jnp.dot(oh, wo[hd * dh:(hd + 1) * dh, :],
                                  preferred_element_type=f32)             # [T, H]
    attn_o = attn_o + bo_ref[...]

    # Post-LN residual block 1.
    x = _layernorm(h + attn_o, ln1g_ref[...], ln1b_ref[...], eps)
    # FFN.
    f = jax.nn.gelu(jnp.dot(x, w1_ref[...], preferred_element_type=f32) + b1_ref[...],
                    approximate=True)
    f = jnp.dot(f, w2_ref[...], preferred_element_type=f32) + b2_ref[...]
    # Post-LN residual block 2.
    out = _layernorm(x + f, ln2g_ref[...], ln2b_ref[...], eps)
    o_ref[0] = out.astype(o_ref.dtype)


def _heads_kernel(h_ref, wml_ref, bml_ref, mu_ref, lv_ref):
    """Fused mu/logvar 1x1-Conv1d heads; writes directly in PyTorch [B, C, T] layout."""
    h = h_ref[0]                                                          # [T, H]
    w = wml_ref[...]                                                      # [2C, H] (transposed, mu rows then logvar rows)
    out = jax.lax.dot_general(w, h, (((1,), (1,)), ((), ())),
                              preferred_element_type=jnp.float32)         # [2C, T]
    out = out + bml_ref[...]                                              # [2C, 1] broadcast over T
    C = mu_ref.shape[1]
    mu_ref[0] = out[:C, :].astype(mu_ref.dtype)
    lv_ref[0] = out[C:, :].astype(lv_ref.dtype)


# ------------------------------ Pallas wrappers -----------------------------

def _shared_spec(shape):
    nd = len(shape)
    return pl.BlockSpec(shape, lambda i, _nd=nd: (0,) * _nd)


def frontend_pallas(patches1, s2, s3, p, eps=1e-5):
    B, T1, K1 = patches1.shape
    H = p["w1"].shape[1]
    T3 = s3.shape[1]
    b = lambda v: v.reshape(1, H)
    return pl.pallas_call(
        functools.partial(_frontend_kernel, eps=eps),
        out_shape=jax.ShapeDtypeStruct((B, T3, H), jnp.float32),
        grid=(B,),
        in_specs=[pl.BlockSpec((1, T1, K1), lambda i: (i, 0, 0)),
                  _shared_spec(p["w1"].shape), _shared_spec((1, H)),
                  _shared_spec(s2.shape), _shared_spec(p["w2"].shape), _shared_spec((1, H)),
                  _shared_spec(s3.shape), _shared_spec(p["w3"].shape), _shared_spec((1, H)),
                  _shared_spec((1, H)), _shared_spec((1, H)),
                  _shared_spec(p["fp_w"].shape), _shared_spec((1, H))],
        out_specs=pl.BlockSpec((1, T3, H), lambda i: (i, 0, 0)),
        compiler_params=pltpu.CompilerParams(dimension_semantics=("parallel",)),
    )(patches1, p["w1"], b(p["b1"]),
      s2, p["w2"], b(p["b2"]),
      s3, p["w3"], b(p["b3"]),
      b(p["fp_ln_g"]), b(p["fp_ln_b"]), p["fp_w"], b(p["fp_b"]))


def layer_pallas(h, lp, n_heads, eps=1e-5):
    B, T, H = h.shape
    F = lp["w1"].shape[1]
    return pl.pallas_call(
        functools.partial(_layer_kernel, n_heads=n_heads, eps=eps),
        out_shape=jax.ShapeDtypeStruct((B, T, H), h.dtype),
        grid=(B,),
        in_specs=[pl.BlockSpec((1, T, H), lambda i: (i, 0, 0)),
                  _shared_spec((H, 3 * H)), _shared_spec((1, 3 * H)),
                  _shared_spec((H, H)), _shared_spec((1, H)),
                  _shared_spec((1, H)), _shared_spec((1, H)),
                  _shared_spec((H, F)), _shared_spec((1, F)),
                  _shared_spec((F, H)), _shared_spec((1, H)),
                  _shared_spec((1, H)), _shared_spec((1, H))],
        out_specs=pl.BlockSpec((1, T, H), lambda i: (i, 0, 0)),
        compiler_params=pltpu.CompilerParams(dimension_semantics=("parallel",)),
    )(h, lp["wqkv"], lp["bqkv"].reshape(1, 3 * H),
      lp["wo"], lp["bo"].reshape(1, H),
      lp["ln1_g"].reshape(1, H), lp["ln1_b"].reshape(1, H),
      lp["w1"], lp["b1"].reshape(1, F),
      lp["w2"], lp["b2"].reshape(1, H),
      lp["ln2_g"].reshape(1, H), lp["ln2_b"].reshape(1, H))


def heads_pallas(h, wml_t, bml):
    B, T, H = h.shape
    C2 = wml_t.shape[0]
    C = C2 // 2
    return pl.pallas_call(
        _heads_kernel,
        out_shape=(jax.ShapeDtypeStruct((B, C, T), h.dtype),
                   jax.ShapeDtypeStruct((B, C, T), h.dtype)),
        grid=(B,),
        in_specs=[pl.BlockSpec((1, T, H), lambda i: (i, 0, 0)),
                  _shared_spec((C2, H)), _shared_spec((C2, 1))],
        out_specs=(pl.BlockSpec((1, C, T), lambda i: (i, 0, 0)),
                   pl.BlockSpec((1, C, T), lambda i: (i, 0, 0))),
        compiler_params=pltpu.CompilerParams(dimension_semantics=("parallel",)),
    )(h, wml_t, bml.reshape(C2, 1))


# ------------------------------- glue (JAX) ---------------------------------

def _sel_matrices(t_out, t_in, kernel, stride):
    """One-hot selection matrices S[tap, t, j] = 1 iff j == t*stride + tap; [k, t_out, t_in]."""
    cols = jnp.arange(t_out)[:, None] * stride + jnp.arange(kernel)[None, :]   # [t_out, k]
    return jax.nn.one_hot(cols.T, t_in, dtype=jnp.float32)


def init_params(key, hidden=32, latent_ch=8, n_heads=4, ffn=64, n_layers=1):
    ks = iter(jax.random.split(key, 64))

    def dense(k, fan_in, fan_out):
        w = jax.random.normal(k, (fan_in, fan_out), jnp.float32) / jnp.sqrt(
            jnp.float32(fan_in))
        return w, jnp.zeros((fan_out,), jnp.float32)

    p = {"hidden": hidden, "n_heads": n_heads, "latent_ch": latent_ch}

    # Feature extractor (Wav2Vec2-style strided convs, synthetic stand-in):
    #   conv1: Cin=1, k=10, s=5 -> weight [10, H]; conv2/3: Cin=H, k=3, s=2 -> per-tap [3, H, H].
    p["w1"], p["b1"] = dense(next(ks), 10, hidden)
    w2, p["b2"] = dense(next(ks), 3 * hidden, hidden)
    p["w2"] = w2.reshape(3, hidden, hidden)
    w3, p["b3"] = dense(next(ks), 3 * hidden, hidden)
    p["w3"] = w3.reshape(3, hidden, hidden)

    # Feature projection (LayerNorm + Linear).
    p["fp_ln_g"] = jnp.ones((hidden,), jnp.float32)
    p["fp_ln_b"] = jnp.zeros((hidden,), jnp.float32)
    p["fp_w"], p["fp_b"] = dense(next(ks), hidden, hidden)

    # Transformer encoder layers (fused QKV weights).
    p["layers"] = []
    for _ in range(n_layers):
        lp = {}
        lp["wqkv"], lp["bqkv"] = dense(next(ks), hidden, 3 * hidden)
        lp["wo"], lp["bo"] = dense(next(ks), hidden, hidden)
        lp["w1"], lp["b1"] = dense(next(ks), hidden, ffn)
        lp["w2"], lp["b2"] = dense(next(ks), ffn, hidden)
        lp["ln1_g"] = jnp.ones((hidden,), jnp.float32)
        lp["ln1_b"] = jnp.zeros((hidden,), jnp.float32)
        lp["ln2_g"] = jnp.ones((hidden,), jnp.float32)
        lp["ln2_b"] = jnp.zeros((hidden,), jnp.float32)
        p["layers"].append(lp)

    # mu / logvar heads: Conv1d(hd, latent_ch, 1) x 2, fused and stored transposed [2C, H].
    wml, bml = dense(next(ks), hidden, 2 * latent_ch)
    p["wml_t"] = wml.T
    p["bml"] = bml
    return p


def audio_encoder_forward(params, wav):
    # wav: [B, 1, L]; PyTorch does wav.squeeze(1) before the backbone.
    inp = jnp.squeeze(wav, axis=1)                                        # [B, L]
    B, L = inp.shape

    # conv1 im2col via cheap reshapes/slices (no gather): frames of 5, concat adjacent.
    k1, s1 = 10, 5
    T1 = (L - k1) // s1 + 1
    frames = inp[:, :s1 * (T1 + 1)].reshape(B, T1 + 1, s1)
    patches1 = jnp.concatenate([frames[:, :T1], frames[:, 1:T1 + 1]], axis=-1)   # [B, T1, 10]

    T2 = (T1 - 3) // 2 + 1
    T3 = (T2 - 3) // 2 + 1
    s2 = _sel_matrices(T2, T1, 3, 2)                                      # [3, T2, T1]
    s3 = _sel_matrices(T3, T2, 3, 2)                                      # [3, T3, T2]

    # One fused kernel: convs + GELU + feature projection. Activations stay [B, T, H].
    h = frontend_pallas(patches1, s2, s3, params)                         # [B, T3, H]

    # TODO(synk): Wav2Vec2 positional conv embedding / group-norm details omitted in stand-in.
    # One fused kernel per transformer layer.
    for lp in params["layers"]:
        h = layer_pallas(h, lp, params["n_heads"])

    # One fused kernel for both heads; writes [B, latent_ch, T] directly (PyTorch Conv1d layout).
    mu, logvar = heads_pallas(h, params["wml_t"], params["bml"])
    return mu, logvar


if __name__ == "__main__":
    key = jax.random.PRNGKey(0)
    kp, kw = jax.random.split(key)
    params = init_params(kp, hidden=32, latent_ch=8, n_heads=4, ffn=64, n_layers=1)

    wav = jax.random.normal(kw, (2, 1, 400), jnp.float32)                 # [B, 1, L]
    mu, logvar = audio_encoder_forward(params, wav)
    jax.block_until_ready((mu, logvar))

    # Feature extractor: 400 -(k10,s5)-> 79 -(k3,s2)-> 39 -(k3,s2)-> 19 frames.
    assert mu.shape == (2, 8, 19), mu.shape
    assert logvar.shape == (2, 8, 19), logvar.shape
    assert mu.dtype == jnp.float32 and logvar.dtype == jnp.float32
    print("KERNEL_OK")
</pallas_src>

<mosaic_0001>
module attributes {stable_mosaic.version = 11 : i64} {
  func.func @_frontend_kernel(%arg0: i32, %arg1: memref<1x79x10xf32, #tpu.memory_space<vmem>>, %arg2: memref<10x32xf32, #tpu.memory_space<vmem>>, %arg3: memref<1x32xf32, #tpu.memory_space<vmem>>, %arg4: memref<3x39x79xf32, #tpu.memory_space<vmem>>, %arg5: memref<3x32x32xf32, #tpu.memory_space<vmem>>, %arg6: memref<1x32xf32, #tpu.memory_space<vmem>>, %arg7: memref<3x19x39xf32, #tpu.memory_space<vmem>>, %arg8: memref<3x32x32xf32, #tpu.memory_space<vmem>>, %arg9: memref<1x32xf32, #tpu.memory_space<vmem>>, %arg10: memref<1x32xf32, #tpu.memory_space<vmem>>, %arg11: memref<1x32xf32, #tpu.memory_space<vmem>>, %arg12: memref<32x32xf32, #tpu.memory_space<vmem>>, %arg13: memref<1x32xf32, #tpu.memory_space<vmem>>, %arg14: memref<1x19x32xf32, #tpu.memory_space<vmem>>) attributes {dimension_semantics = [#tpu.dimension_semantics<parallel>], iteration_bounds = array<i64: 2>, scalar_prefetch = 0 : i64, scratch_operands = 0 : i64, tpu.core_type = #tpu.core_type<tc>, window_params = [{transform_indices = @transform_0, window_bounds = array<i64: 1, 79, 10>}, {pipeline_mode = #tpu.pipeline_mode<synchronous>, transform_indices = @transform_1, window_bounds = array<i64: 10, 32>}, {pipeline_mode = #tpu.pipeline_mode<synchronous>, transform_indices = @transform_2, window_bounds = array<i64: 1, 32>}, {pipeline_mode = #tpu.pipeline_mode<synchronous>, transform_indices = @transform_3, window_bounds = array<i64: 3, 39, 79>}, {pipeline_mode = #tpu.pipeline_mode<synchronous>, transform_indices = @transform_4, window_bounds = array<i64: 3, 32, 32>}, {pipeline_mode = #tpu.pipeline_mode<synchronous>, transform_indices = @transform_5, window_bounds = array<i64: 1, 32>}, {pipeline_mode = #tpu.pipeline_mode<synchronous>, transform_indices = @transform_6, window_bounds = array<i64: 3, 19, 39>}, {pipeline_mode = #tpu.pipeline_mode<synchronous>, transform_indices = @transform_7, window_bounds = array<i64: 3, 32, 32>}, {pipeline_mode = #tpu.pipeline_mode<synchronous>, transform_indices = @transform_8, window_bounds = array<i64: 1, 32>}, {pipeline_mode = #tpu.pipeline_mode<synchronous>, transform_indices = @transform_9, window_bounds = array<i64: 1, 32>}, {pipeline_mode = #tpu.pipeline_mode<synchronous>, transform_indices = @transform_10, window_bounds = array<i64: 1, 32>}, {pipeline_mode = #tpu.pipeline_mode<synchronous>, transform_indices = @transform_11, window_bounds = array<i64: 32, 32>}, {pipeline_mode = #tpu.pipeline_mode<synchronous>, transform_indices = @transform_12, window_bounds = array<i64: 1, 32>}, {transform_indices = @transform_13, window_bounds = array<i64: 1, 19, 32>}]} {
    %c0 = arith.constant 0 : index
    %c0_0 = arith.constant 0 : index
    %c0_1 = arith.constant 0 : index
    %0 = vector.load %arg1[%c0, %c0_0, %c0_1] : memref<1x79x10xf32, #tpu.memory_space<vmem>>, vector<1x79x10xf32>
    %1 = vector.shape_cast %0 : vector<1x79x10xf32> to vector<79x10xf32>
    %c0_2 = arith.constant 0 : index
    %c0_3 = arith.constant 0 : index
    %2 = vector.load %arg2[%c0_2, %c0_3] : memref<10x32xf32, #tpu.memory_space<vmem>>, vector<10x32xf32>
    %cst = arith.constant dense<0.000000e+00> : vector<79x32xf32>
    %3 = tpu.matmul %1, %2, %cst {dimension_numbers = #tpu.dot_dimension_numbers<[1], [0], [0], [1], [0, 0, 1, 1], [], []>} : vector<79x10xf32>, vector<10x32xf32>, vector<79x32xf32> -> vector<79x32xf32>
    %c0_4 = arith.constant 0 : index
    %c0_5 = arith.constant 0 : index
    %4 = vector.load %arg3[%c0_4, %c0_5] : memref<1x32xf32, #tpu.memory_space<vmem>>, vector<1x32xf32>
    %5 = vector.broadcast %4 : vector<1x32xf32> to vector<79x32xf32>
    %6 = arith.addf %3, %5 : vector<79x32xf32>
    %7 = arith.mulf %6, %6 : vector<79x32xf32>
    %8 = arith.mulf %6, %7 : vector<79x32xf32>
    %cst_6 = arith.constant 4.471500e-02 : f32
    %9 = vector.broadcast %cst_6 : f32 to vector<79x32xf32>
    %10 = arith.mulf %9, %8 : vector<79x32xf32>
    %11 = arith.addf %6, %10 : vector<79x32xf32>
    %cst_7 = arith.constant 0.797884583 : f32
    %12 = vector.broadcast %cst_7 : f32 to vector<79x32xf32>
    %13 = arith.mulf %12, %11 : vector<79x32xf32>
    %14 = math.tanh %13 : vector<79x32xf32>
    %cst_8 = arith.constant 1.000000e+00 : f32
    %15 = vector.broadcast %cst_8 : f32 to vector<79x32xf32>
    %16 = arith.addf %15, %14 : vector<79x32xf32>
    %cst_9 = arith.constant 5.000000e-01 : f32
    %17 = vector.broadcast %cst_9 : f32 to vector<79x32xf32>
    %18 = arith.mulf %17, %16 : vector<79x32xf32>
    %19 = arith.mulf %6, %18 : vector<79x32xf32>
    %cst_10 = arith.constant 0.000000e+00 : f32
    %20 = vector.broadcast %cst_10 : f32 to vector<39x32xf32>
    %c0_11 = arith.constant 0 : index
    %c0_12 = arith.constant 0 : index
    %c0_13 = arith.constant 0 : index
    %21 = vector.load %arg4[%c0_11, %c0_12, %c0_13] : memref<3x39x79xf32, #tpu.memory_space<vmem>>, vector<1x39x79xf32>
    %22 = vector.shape_cast %21 : vector<1x39x79xf32> to vector<39x79xf32>
    %cst_14 = arith.constant dense<0.000000e+00> : vector<39x32xf32>
    %23 = tpu.matmul %22, %19, %cst_14 {dimension_numbers = #tpu.dot_dimension_numbers<[1], [0], [0], [1], [0, 0, 1, 1], [], []>} : vector<39x79xf32>, vector<79x32xf32>, vector<39x32xf32> -> vector<39x32xf32>
    %c0_15 = arith.constant 0 : index
    %c0_16 = arith.constant 0 : index
    %c0_17 = arith.constant 0 : index
    %24 = vector.load %arg5[%c0_15, %c0_16, %c0_17] : memref<3x32x32xf32, #tpu.memory_space<vmem>>, vector<1x32x32xf32>
    %25 = vector.shape_cast %24 : vector<1x32x32xf32> to vector<32x32xf32>
    %cst_18 = arith.constant dense<0.000000e+00> : vector<39x32xf32>
    %26 = tpu.matmul %23, %25, %cst_18 {dimension_numbers = #tpu.dot_dimension_numbers<[1], [0], [0], [1], [0, 0, 1, 1], [], []>} : vector<39x32xf32>, vector<32x32xf32>, vector<39x32xf32> -> vector<39x32xf32>
    %27 = arith.addf %20, %26 : vector<39x32xf32>
    %c1 = arith.constant 1 : index
    %c0_19 = arith.constant 0 : index
    %c0_20 = arith.constant 0 : index
    %28 = vector.load %arg4[%c1, %c0_19, %c0_20] : memref<3x39x79xf32, #tpu.memory_space<vmem>>, vector<1x39x79xf32>
    %29 = vector.shape_cast %28 : vector<1x39x79xf32> to vector<39x79xf32>
    %cst_21 = arith.constant dense<0.000000e+00> : vector<39x32xf32>
    %30 = tpu.matmul %29, %19, %cst_21 {dimension_numbers = #tpu.dot_dimension_numbers<[1], [0], [0], [1], [0, 0, 1, 1], [], []>} : vector<39x79xf32>, vector<79x32xf32>, vector<39x32xf32> -> vector<39x32xf32>
    %c1_22 = arith.constant 1 : index
    %c0_23 = arith.constant 0 : index
    %c0_24 = arith.constant 0 : index
    %31 = vector.load %arg5[%c1_22, %c0_23, %c0_24] : memref<3x32x32xf32, #tpu.memory_space<vmem>>, vector<1x32x32xf32>
    %32 = vector.shape_cast %31 : vector<1x32x32xf32> to vector<32x32xf32>
    %cst_25 = arith.constant dense<0.000000e+00> : vector<39x32xf32>
    %33 = tpu.matmul %30, %32, %cst_25 {dimension_numbers = #tpu.dot_dimension_numbers<[1], [0], [0], [1], [0, 0, 1, 1], [], []>} : vector<39x32xf32>, vector<32x32xf32>, vector<39x32xf32> -> vector<39x32xf32>
    %34 = arith.addf %27, %33 : vector<39x32xf32>
    %c2 = arith.constant 2 : index
    %c0_26 = arith.constant 0 : index
    %c0_27 = arith.constant 0 : index
    %35 = vector.load %arg4[%c2, %c0_26, %c0_27] : memref<3x39x79xf32, #tpu.memory_space<vmem>>, vector<1x39x79xf32>
    %36 = vector.shape_cast %35 : vector<1x39x79xf32> to vector<39x79xf32>
    %cst_28 = arith.constant dense<0.000000e+00> : vector<39x32xf32>
    %37 = tpu.matmul %36, %19, %cst_28 {dimension_numbers = #tpu.dot_dimension_numbers<[1], [0], [0], [1], [0, 0, 1, 1], [], []>} : vector<39x79xf32>, vector<79x32xf32>, vector<39x32xf32> -> vector<39x32xf32>
    %c2_29 = arith.constant 2 : index
    %c0_30 = arith.constant 0 : index
    %c0_31 = arith.constant 0 : index
    %38 = vector.load %arg5[%c2_29, %c0_30, %c0_31] : memref<3x32x32xf32, #tpu.memory_space<vmem>>, vector<1x32x32xf32>
    %39 = vector.shape_cast %38 : vector<1x32x32xf32> to vector<32x32xf32>
    %cst_32 = arith.constant dense<0.000000e+00> : vector<39x32xf32>
    %40 = tpu.matmul %37, %39, %cst_32 {dimension_numbers = #tpu.dot_dimension_numbers<[1], [0], [0], [1], [0, 0, 1, 1], [], []>} : vector<39x32xf32>, vector<32x32xf32>, vector<39x32xf32> -> vector<39x32xf32>
    %41 = arith.addf %34, %40 : vector<39x32xf32>
    %c0_33 = arith.constant 0 : index
    %c0_34 = arith.constant 0 : index
    %42 = vector.load %arg6[%c0_33, %c0_34] : memref<1x32xf32, #tpu.memory_space<vmem>>, vector<1x32xf32>
    %43 = vector.broadcast %42 : vector<1x32xf32> to vector<39x32xf32>
    %44 = arith.addf %41, %43 : vector<39x32xf32>
    %45 = arith.mulf %44, %44 : vector<39x32xf32>
    %46 = arith.mulf %44, %45 : vector<39x32xf32>
    %cst_35 = arith.constant 4.471500e-02 : f32
    %47 = vector.broadcast %cst_35 : f32 to vector<39x32xf32>
    %48 = arith.mulf %47, %46 : vector<39x32xf32>
    %49 = arith.addf %44, %48 : vector<39x32xf32>
    %cst_36 = arith.constant 0.797884583 : f32
    %50 = vector.broadcast %cst_36 : f32 to vector<39x32xf32>
    %51 = arith.mulf %50, %49 : vector<39x32xf32>
    %52 = math.tanh %51 : vector<39x32xf32>
    %cst_37 = arith.constant 1.000000e+00 : f32
    %53 = vector.broadcast %cst_37 : f32 to vector<39x32xf32>
    %54 = arith.addf %53, %52 : vector<39x32xf32>
    %cst_38 = arith.constant 5.000000e-01 : f32
    %55 = vector.broadcast %cst_38 : f32 to vector<39x32xf32>
    %56 = arith.mulf %55, %54 : vector<39x32xf32>
    %57 = arith.mulf %44, %56 : vector<39x32xf32>
    %cst_39 = arith.constant 0.000000e+00 : f32
    %58 = vector.broadcast %cst_39 : f32 to vector<19x32xf32>
    %c0_40 = arith.constant 0 : index
    %c0_41 = arith.constant 0 : index
    %c0_42 = arith.constant 0 : index
    %59 = vector.load %arg7[%c0_40, %c0_41, %c0_42] : memref<3x19x39xf32, #tpu.memory_space<vmem>>, vector<1x19x39xf32>
    %60 = vector.shape_cast %59 : vector<1x19x39xf32> to vector<19x39xf32>
    %cst_43 = arith.constant dense<0.000000e+00> : vector<19x32xf32>
    %61 = tpu.matmul %60, %57, %cst_43 {dimension_numbers = #tpu.dot_dimension_numbers<[1], [0], [0], [1], [0, 0, 1, 1], [], []>} : vector<19x39xf32>, vector<39x32xf32>, vector<19x32xf32> -> vector<19x32xf32>
    %c0_44 = arith.constant 0 : index
    %c0_45 = arith.constant 0 : index
    %c0_46 = arith.constant 0 : index
    %62 = vector.load %arg8[%c0_44, %c0_45, %c0_46] : memref<3x32x32xf32, #tpu.memory_space<vmem>>, vector<1x32x32xf32>
    %63 = vector.shape_cast %62 : vector<1x32x32xf32> to vector<32x32xf32>
    %cst_47 = arith.constant dense<0.000000e+00> : vector<19x32xf32>
    %64 = tpu.matmul %61, %63, %cst_47 {dimension_numbers = #tpu.dot_dimension_numbers<[1], [0], [0], [1], [0, 0, 1, 1], [], []>} : vector<19x32xf32>, vector<32x32xf32>, vector<19x32xf32> -> vector<19x32xf32>
    %65 = arith.addf %58, %64 : vector<19x32xf32>
    %c1_48 = arith.constant 1 : index
    %c0_49 = arith.constant 0 : index
    %c0_50 = arith.constant 0 : index
    %66 = vector.load %arg7[%c1_48, %c0_49, %c0_50] : memref<3x19x39xf32, #tpu.memory_space<vmem>>, vector<1x19x39xf32>
    %67 = vector.shape_cast %66 : vector<1x19x39xf32> to vector<19x39xf32>
    %cst_51 = arith.constant dense<0.000000e+00> : vector<19x32xf32>
    %68 = tpu.matmul %67, %57, %cst_51 {dimension_numbers = #tpu.dot_dimension_numbers<[1], [0], [0], [1], [0, 0, 1, 1], [], []>} : vector<19x39xf32>, vector<39x32xf32>, vector<19x32xf32> -> vector<19x32xf32>
    %c1_52 = arith.constant 1 : index
    %c0_53 = arith.constant 0 : index
    %c0_54 = arith.constant 0 : index
    %69 = vector.load %arg8[%c1_52, %c0_53, %c0_54] : memref<3x32x32xf32, #tpu.memory_space<vmem>>, vector<1x32x32xf32>
    %70 = vector.shape_cast %69 : vector<1x32x32xf32> to vector<32x32xf32>
    %cst_55 = arith.constant dense<0.000000e+00> : vector<19x32xf32>
    %71 = tpu.matmul %68, %70, %cst_55 {dimension_numbers = #tpu.dot_dimension_numbers<[1], [0], [0], [1], [0, 0, 1, 1], [], []>} : vector<19x32xf32>, vector<32x32xf32>, vector<19x32xf32> -> vector<19x32xf32>
    %72 = arith.addf %65, %71 : vector<19x32xf32>
    %c2_56 = arith.constant 2 : index
    %c0_57 = arith.constant 0 : index
    %c0_58 = arith.constant 0 : index
    %73 = vector.load %arg7[%c2_56, %c0_57, %c0_58] : memref<3x19x39xf32, #tpu.memory_space<vmem>>, vector<1x19x39xf32>
    %74 = vector.shape_cast %73 : vector<1x19x39xf32> to vector<19x39xf32>
    %cst_59 = arith.constant dense<0.000000e+00> : vector<19x32xf32>
    %75 = tpu.matmul %74, %57, %cst_59 {dimension_numbers = #tpu.dot_dimension_numbers<[1], [0], [0], [1], [0, 0, 1, 1], [], []>} : vector<19x39xf32>, vector<39x32xf32>, vector<19x32xf32> -> vector<19x32xf32>
    %c2_60 = arith.constant 2 : index
    %c0_61 = arith.constant 0 : index
    %c0_62 = arith.constant 0 : index
    %76 = vector.load %arg8[%c2_60, %c0_61, %c0_62] : memref<3x32x32xf32, #tpu.memory_space<vmem>>, vector<1x32x32xf32>
    %77 = vector.shape_cast %76 : vector<1x32x32xf32> to vector<32x32xf32>
    %cst_63 = arith.constant dense<0.000000e+00> : vector<19x32xf32>
    %78 = tpu.matmul %75, %77, %cst_63 {dimension_numbers = #tpu.dot_dimension_numbers<[1], [0], [0], [1], [0, 0, 1, 1], [], []>} : vector<19x32xf32>, vector<32x32xf32>, vector<19x32xf32> -> vector<19x32xf32>
    %79 = arith.addf %72, %78 : vector<19x32xf32>
    %c0_64 = arith.constant 0 : index
    %c0_65 = arith.constant 0 : index
    %80 = vector.load %arg9[%c0_64, %c0_65] : memref<1x32xf32, #tpu.memory_space<vmem>>, vector<1x32xf32>
    %81 = vector.broadcast %80 : vector<1x32xf32> to vector<19x32xf32>
    %82 = arith.addf %79, %81 : vector<19x32xf32>
    %83 = arith.mulf %82, %82 : vector<19x32xf32>
    %84 = arith.mulf %82, %83 : vector<19x32xf32>
    %cst_66 = arith.constant 4.471500e-02 : f32
    %85 = vector.broadcast %cst_66 : f32 to vector<19x32xf32>
    %86 = arith.mulf %85, %84 : vector<19x32xf32>
    %87 = arith.addf %82, %86 : vector<19x32xf32>
    %cst_67 = arith.constant 0.797884583 : f32
    %88 = vector.broadcast %cst_67 : f32 to vector<19x32xf32>
    %89 = arith.mulf %88, %87 : vector<19x32xf32>
    %90 = math.tanh %89 : vector<19x32xf32>
    %cst_68 = arith.constant 1.000000e+00 : f32
    %91 = vector.broadcast %cst_68 : f32 to vector<19x32xf32>
    %92 = arith.addf %91, %90 : vector<19x32xf32>
    %cst_69 = arith.constant 5.000000e-01 : f32
    %93 = vector.broadcast %cst_69 : f32 to vector<19x32xf32>
    %94 = arith.mulf %93, %92 : vector<19x32xf32>
    %95 = arith.mulf %82, %94 : vector<19x32xf32>
    %c0_70 = arith.constant 0 : index
    %c0_71 = arith.constant 0 : index
    %96 = vector.load %arg10[%c0_70, %c0_71] : memref<1x32xf32, #tpu.memory_space<vmem>>, vector<1x32xf32>
    %c0_72 = arith.constant 0 : index
    %c0_73 = arith.constant 0 : index
    %97 = vector.load %arg11[%c0_72, %c0_73] : memref<1x32xf32, #tpu.memory_space<vmem>>, vector<1x32xf32>
    %cst_74 = arith.constant dense<0.000000e+00> : vector<19xf32>
    %98 = vector.multi_reduction <add>, %95, %cst_74 [1] : vector<19x32xf32> to vector<19xf32>
    %99 = vector.shape_cast %98 : vector<19xf32> to vector<19x1xf32>
    %cst_75 = arith.constant 3.200000e+01 : f32
    %100 = vector.broadcast %cst_75 : f32 to vector<19x1xf32>
    %101 = arith.divf %99, %100 : vector<19x1xf32>
    %102 = vector.broadcast %101 : vector<19x1xf32> to vector<19x32xf32>
    %103 = arith.subf %95, %102 : vector<19x32xf32>
    %104 = arith.mulf %103, %103 : vector<19x32xf32>
    %cst_76 = arith.constant dense<0.000000e+00> : vector<19xf32>
    %105 = vector.multi_reduction <add>, %104, %cst_76 [1] : vector<19x32xf32> to vector<19xf32>
    %106 = vector.shape_cast %105 : vector<19xf32> to vector<19x1xf32>
    %cst_77 = arith.constant 3.200000e+01 : f32
    %107 = vector.broadcast %cst_77 : f32 to vector<19x1xf32>
    %108 = arith.divf %106, %107 : vector<19x1xf32>
    %109 = vector.broadcast %101 : vector<19x1xf32> to vector<19x32xf32>
    %110 = arith.subf %95, %109 : vector<19x32xf32>
    %cst_78 = arith.constant 9.99999974E-6 : f32
    %111 = vector.broadcast %cst_78 : f32 to vector<19x1xf32>
    %112 = arith.addf %108, %111 : vector<19x1xf32>
    %113 = math.rsqrt %112 : vector<19x1xf32>
    %114 = vector.broadcast %113 : vector<19x1xf32> to vector<19x32xf32>
    %115 = arith.mulf %110, %114 : vector<19x32xf32>
    %116 = vector.broadcast %96 : vector<1x32xf32> to vector<19x32xf32>
    %117 = arith.mulf %115, %116 : vector<19x32xf32>
    %118 = vector.broadcast %97 : vector<1x32xf32> to vector<19x32xf32>
    %119 = arith.addf %117, %118 : vector<19x32xf32>
    %c0_79 = arith.constant 0 : index
    %c0_80 = arith.constant 0 : index
    %120 = vector.load %arg12[%c0_79, %c0_80] : memref<32x32xf32, #tpu.memory_space<vmem>>, vector<32x32xf32>
    %cst_81 = arith.constant dense<0.000000e+00> : vector<19x32xf32>
    %121 = tpu.matmul %119, %120, %cst_81 {dimension_numbers = #tpu.dot_dimension_numbers<[1], [0], [0], [1], [0, 0, 1, 1], [], []>} : vector<19x32xf32>, vector<32x32xf32>, vector<19x32xf32> -> vector<19x32xf32>
    %c0_82 = arith.constant 0 : index
    %c0_83 = arith.constant 0 : index
    %122 = vector.load %arg13[%c0_82, %c0_83] : memref<1x32xf32, #tpu.memory_space<vmem>>, vector<1x32xf32>
    %123 = vector.broadcast %122 : vector<1x32xf32> to vector<19x32xf32>
    %124 = arith.addf %121, %123 : vector<19x32xf32>
    %c0_84 = arith.constant 0 : index
    %c0_85 = arith.constant 0 : index
    %c0_86 = arith.constant 0 : index
    %125 = vector.load %arg14[%c0_84, %c0_85, %c0_86] : memref<1x19x32xf32, #tpu.memory_space<vmem>>, vector<1x19x32xf32>
    %126 = vector.shape_cast %125 : vector<1x19x32xf32> to vector<19x32xf32>
    %127 = vector.shape_cast %124 : vector<19x32xf32> to vector<1x19x32xf32>
    tpu.vector_store %arg14[%c0_84, %c0_85, %c0_86], %127 {strides = array<i32>} : memref<1x19x32xf32, #tpu.memory_space<vmem>>, vector<1x19x32xf32>,
    return
  }
  func.func @transform_0(%arg0: i32) -> (i32, i32, i32) {
    %c0_i32 = arith.constant 0 : i32
    %c0_i32_0 = arith.constant 0 : i32
    %c0_i32_1 = arith.constant 0 : i32
    return %arg0, %c0_i32, %c0_i32_0 : i32, i32, i32
  }
  func.func @transform_1(%arg0: i32) -> (i32, i32) {
    %c0_i32 = arith.constant 0 : i32
    %c0_i32_0 = arith.constant 0 : i32
    %c0_i32_1 = arith.constant 0 : i32
    return %c0_i32, %c0_i32_0 : i32, i32
  }
  func.func @transform_2(%arg0: i32) -> (i32, i32) {
    %c0_i32 = arith.constant 0 : i32
    %c0_i32_0 = arith.constant 0 : i32
    %c0_i32_1 = arith.constant 0 : i32
    return %c0_i32, %c0_i32_0 : i32, i32
  }
  func.func @transform_3(%arg0: i32) -> (i32, i32, i32) {
    %c0_i32 = arith.constant 0 : i32
    %c0_i32_0 = arith.constant 0 : i32
    %c0_i32_1 = arith.constant 0 : i32
    %c0_i32_2 = arith.constant 0 : i32
    return %c0_i32, %c0_i32_0, %c0_i32_1 : i32, i32, i32
  }
  func.func @transform_4(%arg0: i32) -> (i32, i32, i32) {
    %c0_i32 = arith.constant 0 : i32
    %c0_i32_0 = arith.constant 0 : i32
    %c0_i32_1 = arith.constant 0 : i32
    %c0_i32_2 = arith.constant 0 : i32
    return %c0_i32, %c0_i32_0, %c0_i32_1 : i32, i32, i32
  }
  func.func @transform_5(%arg0: i32) -> (i32, i32) {
    %c0_i32 = arith.constant 0 : i32
    %c0_i32_0 = arith.constant 0 : i32
    %c0_i32_1 = arith.constant 0 : i32
    return %c0_i32, %c0_i32_0 : i32, i32
  }
  func.func @transform_6(%arg0: i32) -> (i32, i32, i32) {
    %c0_i32 = arith.constant 0 : i32
    %c0_i32_0 = arith.constant 0 : i32
    %c0_i32_1 = arith.constant 0 : i32
    %c0_i32_2 = arith.constant 0 : i32
    return %c0_i32, %c0_i32_0, %c0_i32_1 : i32, i32, i32
  }
  func.func @transform_7(%arg0: i32) -> (i32, i32, i32) {
    %c0_i32 = arith.constant 0 : i32
    %c0_i32_0 = arith.constant 0 : i32
    %c0_i32_1 = arith.constant 0 : i32
    %c0_i32_2 = arith.constant 0 : i32
    return %c0_i32, %c0_i32_0, %c0_i32_1 : i32, i32, i32
  }
  func.func @transform_8(%arg0: i32) -> (i32, i32) {
    %c0_i32 = arith.constant 0 : i32
    %c0_i32_0 = arith.constant 0 : i32
    %c0_i32_1 = arith.constant 0 : i32
    return %c0_i32, %c0_i32_0 : i32, i32
  }
  func.func @transform_9(%arg0: i32) -> (i32, i32) {
    %c0_i32 = arith.constant 0 : i32
    %c0_i32_0 = arith.constant 0 : i32
    %c0_i32_1 = arith.constant 0 : i32
    return %c0_i32, %c0_i32_0 : i32, i32
  }
  func.func @transform_10(%arg0: i32) -> (i32, i32) {
    %c0_i32 = arith.constant 0 : i32
    %c0_i32_0 = arith.constant 0 : i32
    %c0_i32_1 = arith.constant 0 : i32
    return %c0_i32, %c0_i32_0 : i32, i32
  }
  func.func @transform_11(%arg0: i32) -> (i32, i32) {
    %c0_i32 = arith.constant 0 : i32
    %c0_i32_0 = arith.constant 0 : i32
    %c0_i32_1 = arith.constant 0 : i32
    return %c0_i32, %c0_i32_0 : i32, i32
  }
  func.func @transform_12(%arg0: i32) -> (i32, i32) {
    %c0_i32 = arith.constant 0 : i32
    %c0_i32_0 = arith.constant 0 : i32
    %c0_i32_1 = arith.constant 0 : i32
    return %c0_i32, %c0_i32_0 : i32, i32
  }
  func.func @transform_13(%arg0: i32) -> (i32, i32, i32) {
    %c0_i32 = arith.constant 0 : i32
    %c0_i32_0 = arith.constant 0 : i32
    %c0_i32_1 = arith.constant 0 : i32
    return %arg0, %c0_i32, %c0_i32_0 : i32, i32, i32
  }
}

</mosaic_0001>

<llo_original>
// kernel: tpu_custom_call.1
$region0: #{tpu_custom_call.1}
  #allocation0 [shape = 'u32[]', space=smem, size = 0x4, offset = 0x4, fixed_abs, tag = 'smem constant byte address 0x4 - core index']
  #allocation1 [shape = 'u32[144,128]{1,0:T(1,128)}', space=vmem, size = 0x12000, scoped, tag = 'internal scratch']
  %s0 = inlined_call_operand.vmem [shape: f32[2,79,10], index: 0, kind: input, shape index: {}]
  %s1 = inlined_call_operand.vmem [shape: f32[10,32], index: 1, kind: input, shape index: {}]
  %s2 = inlined_call_operand.vmem [shape: f32[1,32], index: 2, kind: input, shape index: {}]
  %s3 = inlined_call_operand.vmem [shape: f32[3,39,79], index: 3, kind: input, shape index: {}]
  %s4 = inlined_call_operand.hbm [shape: f32[3,32,32], index: 4, kind: input, shape index: {}]
  %s5 = inlined_call_operand.vmem [shape: f32[1,32], index: 5, kind: input, shape index: {}]
  %s6 = inlined_call_operand.hbm [shape: f32[3,19,39], index: 6, kind: input, shape index: {}]
  %s7 = inlined_call_operand.hbm [shape: f32[3,32,32], index: 7, kind: input, shape index: {}]
  %s8 = inlined_call_operand.vmem [shape: f32[1,32], index: 8, kind: input, shape index: {}]
  %s9 = inlined_call_operand.vmem [shape: f32[1,32], index: 9, kind: input, shape index: {}]
  %s10 = inlined_call_operand.vmem [shape: f32[1,32], index: 10, kind: input, shape index: {}]
  %s11 = inlined_call_operand.vmem [shape: f32[32,32], index: 11, kind: input, shape index: {}]
  %s12 = inlined_call_operand.vmem [shape: f32[1,32], index: 12, kind: input, shape index: {}]
  %s13 = inlined_call_operand.vmem [shape: f32[2,19,32], index: 13, kind: output, shape index: {}]
  %s14 = sld [smem:[#allocation0]]
  $region97: #{tpu_custom_call.1} parent=0
    _
  %s16 = ssub.s32 1, %s14
  %s17 = scalar_select 0, %s16, %s14
  $region1: #{tpu_custom_call.1} parent=0
    #allocation2 [shape = 'u8[49152]{0}', space=vmem, size = 0xc000, scoped, tag = 'input window, operand 4, single buffered']
    #allocation3 [shape = 's32[2]{0}', space=sflag, size = 0x8, scoped, tag = 'scoped memory for tpu_custom_call.1']
    #allocation4 [shape = 'u8[36864]{0}', space=vmem, size = 0x9000, scoped, tag = 'input window, operand 6, single buffered']
    #allocation5 [shape = 's32[1]{0}', space=sflag, size = 0x4, scoped, tag = 'scoped memory for tpu_custom_call.1']
    #allocation6 [shape = 'u8[49152]{0}', space=vmem, size = 0xc000, scoped, tag = 'input window, operand 7, single buffered']
    %18 = vsyncpa [#allocation3], 0
    %19 = vsyncpa [#allocation5], 0
    loop: start=0, step=1, limit=4
    $region2: #{tpu_custom_call.1} parent=1 // loop_pre_header
      _
    $region3: #{tpu_custom_call.1} parent=1 // loop_header
      %s21 = sphi 0, %s25
      %p22 = scmp.ge.s32.totalorder %s21, 4
      %s31 = sphi 0, %s33
      %s34 = sphi 0, %s31
      %s35 = sphi 0, %s34
      %s51 = sphi 0, %s35
      %s55 = sphi 0, %s55
      %s57 = sphi 0, %s55
      %s58 = sphi 0, %s57
      %s72 = sphi 0, %s58
      %s76 = sphi 0, %s76
      %s78 = sphi 0, %s76
      %s79 = sphi 0, %s78
      %s93 = sphi 0, %s79
      %s97 = sphi 0, %s97
      %s99 = sphi 0, %s97
      %s100 = sphi 0, %s99
      %s114 = sphi 0, %s100
      %s118 = sphi 0, %s118
      %s120 = sphi 0, %s118
      %s121 = sphi 0, %s120
      %s135 = sphi 0, %s121
      %s139 = sphi 0, %s139
      %s141 = sphi 0, %s139
      %s142 = sphi 0, %s141
      %s156 = sphi 0, %s142
      %s160 = sphi 0, %s160
      %s162 = sphi 0, %s160
      %s163 = sphi 0, %s162
      %s177 = sphi 0, %s163
      %s181 = sphi 0, %s181
      %s183 = sphi 0, %s181
      %s184 = sphi 0, %s183
      %s198 = sphi 0, %s184
      %s202 = sphi 0, %s202
      %s204 = sphi 0, %s202
      %s205 = sphi 0, %s204
      %s219 = sphi 0, %s205
      %s223 = sphi 0, %s223
      %s225 = sphi 0, %s223
      %s226 = sphi 0, %s225
      %s240 = sphi 0, %s226
      %s244 = sphi 0, %s244
      %s246 = sphi 0, %s244
      %s247 = sphi 0, %s246
      %s261 = sphi 0, %s247
      %s265 = sphi 0, %s265
      %s267 = sphi 0, %s265
      %s268 = sphi 0, %s267
      %s282 = sphi 0, %s268
      %s286 = sphi 0, %s286
      %s288 = sphi 0, %s286
      %s289 = sphi 0, %s288
      %s303 = sphi 0, %s289
      %s309 = sphi 0, %s311
      %s312 = sphi 0, %s309
      %s313 = sphi 0, %s312
      %s329 = sphi 0, %s313
    $region4: #{tpu_custom_call.1} parent=1 // loop_header_branch
      %24 = sbr.rel (%p22) target = $region8
    $region5: #{tpu_custom_call.1} parent=1 // loop_body
      %s26 = ssub.s32 %s21, 1
      %s27 = ssub.s32 %s21, 2
      %s28 = sadd.s32 %s21, 1
      %s29 = ssub.s32 %s21, %s28
      %p30 = scmp.eq.s32.totalorder %s29, 0
      %s32 = sadd.s32 %s31, 1
      %s33 = scalar_select %p30, %s31, %s32
      %p36 = pneg %p30
      %p37 = scmp.eq.s32.totalorder %s21, 1
      %p38 = por %p36, %p37
      %p39 = scmp.ne.s32.totalorder %s31, %s34
      %p40 = scmp.eq.s32.totalorder %s21, 0
      %p41 = por %p39, %p40
      %p42 = scmp.ne.s32.totalorder %s31, %s34
      %p43 = scmp.eq.s32.totalorder %s26, 1
      %p44 = por %p42, %p43
      %p45 = scmp.ne.s32.totalorder %s34, %s35
      %p46 = scmp.eq.s32.totalorder %s26, 0
      %p47 = por %p45, %p46
      %p48 = scmp.ne.s32.totalorder %s34, %s35
      %p49 = scmp.eq.s32.totalorder %s27, 1
      %p50 = por %p48, %p49
      %p52 = scmp.ne.s32.totalorder %s35, %s51
      %p53 = scmp.eq.s32.totalorder %s27, 0
      %p54 = por %p52, %p53
      %s56 = sadd.s32 %s55, 1
      %p59 = scmp.eq.s32.totalorder %s21, 1
      %p60 = scmp.ne.s32.totalorder %s55, %s57
      %p61 = scmp.eq.s32.totalorder %s21, 0
      %p62 = por %p60, %p61
      %p63 = scmp.ne.s32.totalorder %s55, %s57
      %p64 = scmp.eq.s32.totalorder %s26, 1
      %p65 = por %p63, %p64
      %p66 = scmp.ne.s32.totalorder %s57, %s58
      %p67 = scmp.eq.s32.totalorder %s26, 0
      %p68 = por %p66, %p67
      %p69 = scmp.ne.s32.totalorder %s57, %s58
      %p70 = scmp.eq.s32.totalorder %s27, 1
      %p71 = por %p69, %p70
      %p73 = scmp.ne.s32.totalorder %s58, %s72
      %p74 = scmp.eq.s32.totalorder %s27, 0
      %p75 = por %p73, %p74
      %s77 = sadd.s32 %s76, 1
      %p80 = scmp.eq.s32.totalorder %s21, 1
      %p81 = scmp.ne.s32.totalorder %s76, %s78
      %p82 = scmp.eq.s32.totalorder %s21, 0
      %p83 = por %p81, %p82
      %p84 = scmp.ne.s32.totalorder %s76, %s78
      %p85 = scmp.eq.s32.totalorder %s26, 1
      %p86 = por %p84, %p85
      %p87 = scmp.ne.s32.totalorder %s78, %s79
      %p88 = scmp.eq.s32.totalorder %s26, 0
      %p89 = por %p87, %p88
      %p90 = scmp.ne.s32.totalorder %s78, %s79
      %p91 = scmp.eq.s32.totalorder %s27, 1
      %p92 = por %p90, %p91
      %p94 = scmp.ne.s32.totalorder %s79, %s93
      %p95 = scmp.eq.s32.totalorder %s27, 0
      %p96 = por %p94, %p95
      %s98 = sadd.s32 %s97, 1
      %p101 = scmp.eq.s32.totalorder %s21, 1
      %p102 = scmp.ne.s32.totalorder %s97, %s99
      %p103 = scmp.eq.s32.totalorder %s21, 0
      %p104 = por %p102, %p103
      %p105 = scmp.ne.s32.totalorder %s97, %s99
      %p106 = scmp.eq.s32.totalorder %s26, 1
      %p107 = por %p105, %p106
      %p108 = scmp.ne.s32.totalorder %s99, %s100
      %p109 = scmp.eq.s32.totalorder %s26, 0
      %p110 = por %p108, %p109
      %p111 = scmp.ne.s32.totalorder %s99, %s100
      %p112 = scmp.eq.s32.totalorder %s27, 1
      %p113 = por %p111, %p112
      %p115 = scmp.ne.s32.totalorder %s100, %s114
      %p116 = scmp.eq.s32.totalorder %s27, 0
      %p117 = por %p115, %p116
      %s119 = sadd.s32 %s118, 1
      %p122 = scmp.eq.s32.totalorder %s21, 1
      %p123 = scmp.ne.s32.totalorder %s118, %s120
      %p124 = scmp.eq.s32.totalorder %s21, 0
      %p125 = por %p123, %p124
      %p126 = scmp.ne.s32.totalorder %s118, %s120
      %p127 = scmp.eq.s32.totalorder %s26, 1
      %p128 = por %p126, %p127
      %p129 = scmp.ne.s32.totalorder %s120, %s121
      %p130 = scmp.eq.s32.totalorder %s26, 0
      %p131 = por %p129, %p130
      %p132 = scmp.ne.s32.totalorder %s120, %s121
      %p133 = scmp.eq.s32.totalorder %s27, 1
      %p134 = por %p132, %p133
      %p136 = scmp.ne.s32.totalorder %s121, %s135
      %p137 = scmp.eq.s32.totalorder %s27, 0
      %p138 = por %p136, %p137
      %s140 = sadd.s32 %s139, 1
      %p143 = scmp.eq.s32.totalorder %s21, 1
      %p144 = scmp.ne.s32.totalorder %s139, %s141
      %p145 = scmp.eq.s32.totalorder %s21, 0
      %p146 = por %p144, %p145
      %p147 = scmp.ne.s32.totalorder %s139, %s141
      %p148 = scmp.eq.s32.totalorder %s26, 1
      %p149 = por %p147, %p148
      %p150 = scmp.ne.s32.totalorder %s141, %s142
      %p151 = scmp.eq.s32.totalorder %s26, 0
      %p152 = por %p150, %p151
      %p153 = scmp.ne.s32.totalorder %s141, %s142
      %p154 = scmp.eq.s32.totalorder %s27, 1
      %p155 = por %p153, %p154
      %p157 = scmp.ne.s32.totalorder %s142, %s156
      %p158 = scmp.eq.s32.totalorder %s27, 0
      %p159 = por %p157, %p158
      %s161 = sadd.s32 %s160, 1
      %p164 = scmp.eq.s32.totalorder %s21, 1
      %p165 = scmp.ne.s32.totalorder %s160, %s162
      %p166 = scmp.eq.s32.totalorder %s21, 0
      %p167 = por %p165, %p166
      %p168 = scmp.ne.s32.totalorder %s160, %s162
      %p169 = scmp.eq.s32.totalorder %s26, 1
      %p170 = por %p168, %p169
      %p171 = scmp.ne.s32.totalorder %s162, %s163
      %p172 = scmp.eq.s32.totalorder %s26, 0
      %p173 = por %p171, %p172
      %p174 = scmp.ne.s32.totalorder %s162, %s163
      %p175 = scmp.eq.s32.totalorder %s27, 1
      %p176 = por %p174, %p175
      %p178 = scmp.ne.s32.totalorder %s163, %s177
      %p179 = scmp.eq.s32.totalorder %s27, 0
      %p180 = por %p178, %p179
      %s182 = sadd.s32 %s181, 1
      %p185 = scmp.eq.s32.totalorder %s21, 1
      %p186 = scmp.ne.s32.totalorder %s181, %s183
      %p187 = scmp.eq.s32.totalorder %s21, 0
      %p188 = por %p186, %p187
      %p189 = scmp.ne.s32.totalorder %s181, %s183
      %p190 = scmp.eq.s32.totalorder %s26, 1
      %p191 = por %p189, %p190
      %p192 = scmp.ne.s32.totalorder %s183, %s184
      %p193 = scmp.eq.s32.totalorder %s26, 0
      %p194 = por %p192, %p193
      %p195 = scmp.ne.s32.totalorder %s183, %s184
      %p196 = scmp.eq.s32.totalorder %s27, 1
      %p197 = por %p195, %p196
      %p199 = scmp.ne.s32.totalorder %s184, %s198
      %p200 = scmp.eq.s32.totalorder %s27, 0
      %p201 = por %p199, %p200
      %s203 = sadd.s32 %s202, 1
      %p206 = scmp.eq.s32.totalorder %s21, 1
      %p207 = scmp.ne.s32.totalorder %s202, %s204
      %p208 = scmp.eq.s32.totalorder %s21, 0
      %p209 = por %p207, %p208
      %p210 = scmp.ne.s32.totalorder %s202, %s204
      %p211 = scmp.eq.s32.totalorder %s26, 1
      %p212 = por %p210, %p211
      %p213 = scmp.ne.s32.totalorder %s204, %s205
      %p214 = scmp.eq.s32.totalorder %s26, 0
      %p215 = por %p213, %p214
      %p216 = scmp.ne.s32.totalorder %s204, %s205
      %p217 = scmp.eq.s32.totalorder %s27, 1
      %p218 = por %p216, %p217
      %p220 = scmp.ne.s32.totalorder %s205, %s219
      %p221 = scmp.eq.s32.totalorder %s27, 0
      %p222 = por %p220, %p221
      %s224 = sadd.s32 %s223, 1
      %p227 = scmp.eq.s32.totalorder %s21, 1
      %p228 = scmp.ne.s32.totalorder %s223, %s225
      %p229 = scmp.eq.s32.totalorder %s21, 0
      %p230 = por %p228, %p229
      %p231 = scmp.ne.s32.totalorder %s223, %s225
      %p232 = scmp.eq.s32.totalorder %s26, 1
      %p233 = por %p231, %p232
      %p234 = scmp.ne.s32.totalorder %s225, %s226
      %p235 = scmp.eq.s32.totalorder %s26, 0
      %p236 = por %p234, %p235
      %p237 = scmp.ne.s32.totalorder %s225, %s226
      %p238 = scmp.eq.s32.totalorder %s27, 1
      %p239 = por %p237, %p238
      %p241 = scmp.ne.s32.totalorder %s226, %s240
      %p242 = scmp.eq.s32.totalorder %s27, 0
      %p243 = por %p241, %p242
      %s245 = sadd.s32 %s244, 1
      %p248 = scmp.eq.s32.totalorder %s21, 1
      %p249 = scmp.ne.s32.totalorder %s244, %s246
      %p250 = scmp.eq.s32.totalorder %s21, 0
      %p251 = por %p249, %p250
      %p252 = scmp.ne.s32.totalorder %s244, %s246
      %p253 = scmp.eq.s32.totalorder %s26, 1
      %p254 = por %p252, %p253
      %p255 = scmp.ne.s32.totalorder %s246, %s247
      %p256 = scmp.eq.s32.totalorder %s26, 0
      %p257 = por %p255, %p256
      %p258 = scmp.ne.s32.totalorder %s246, %s247
      %p259 = scmp.eq.s32.totalorder %s27, 1
      %p260 = por %p258, %p259
      %p262 = scmp.ne.s32.totalorder %s247, %s261
      %p263 = scmp.eq.s32.totalorder %s27, 0
      %p264 = por %p262, %p263
      %s266 = sadd.s32 %s265, 1
      %p269 = scmp.eq.s32.totalorder %s21, 1
      %p270 = scmp.ne.s32.totalorder %s265, %s267
      %p271 = scmp.eq.s32.totalorder %s21, 0
      %p272 = por %p270, %p271
      %p273 = scmp.ne.s32.totalorder %s265, %s267
      %p274 = scmp.eq.s32.totalorder %s26, 1
      %p275 = por %p273, %p274
      %p276 = scmp.ne.s32.totalorder %s267, %s268
      %p277 = scmp.eq.s32.totalorder %s26, 0
      %p278 = por %p276, %p277
      %p279 = scmp.ne.s32.totalorder %s267, %s268
      %p280 = scmp.eq.s32.totalorder %s27, 1
      %p281 = por %p279, %p280
      %p283 = scmp.ne.s32.totalorder %s268, %s282
      %p284 = scmp.eq.s32.totalorder %s27, 0
      %p285 = por %p283, %p284
      %s287 = sadd.s32 %s286, 1
      %p290 = scmp.eq.s32.totalorder %s21, 1
      %p291 = scmp.ne.s32.totalorder %s286, %s288
      %p292 = scmp.eq.s32.totalorder %s21, 0
      %p293 = por %p291, %p292
      %p294 = scmp.ne.s32.totalorder %s286, %s288
      %p295 = scmp.eq.s32.totalorder %s26, 1
      %p296 = por %p294, %p295
      %p297 = scmp.ne.s32.totalorder %s288, %s289
      %p298 = scmp.eq.s32.totalorder %s26, 0
      %p299 = por %p297, %p298
      %p300 = scmp.ne.s32.totalorder %s288, %s289
      %p301 = scmp.eq.s32.totalorder %s27, 1
      %p302 = por %p300, %p301
      %p304 = scmp.ne.s32.totalorder %s289, %s303
      %p305 = scmp.eq.s32.totalorder %s27, 0
      %p306 = por %p304, %p305
      %s307 = ssub.s32 %s21, %s28
      %p308 = scmp.eq.s32.totalorder %s307, 0
      %s310 = sadd.s32 %s309, 1
      %s311 = scalar_select %p308, %s309, %s310
      %p314 = pneg %p308
      %p315 = scmp.eq.s32.totalorder %s21, 1
      %p316 = por %p314, %p315
      %p317 = scmp.ne.s32.totalorder %s309, %s312
      %p318 = scmp.eq.s32.totalorder %s21, 0
      %p319 = por %p317, %p318
      %p320 = scmp.ne.s32.totalorder %s309, %s312
      %p321 = scmp.eq.s32.totalorder %s26, 1
      %p322 = por %p320, %p321
      %p323 = scmp.ne.s32.totalorder %s312, %s313
      %p324 = scmp.eq.s32.totalorder %s26, 0
      %p325 = por %p323, %p324
      %p326 = scmp.ne.s32.totalorder %s312, %s313
      %p327 = scmp.eq.s32.totalorder %s27, 1
      %p328 = por %p326, %p327
      %p330 = scmp.ne.s32.totalorder %s313, %s329
      %p331 = scmp.eq.s32.totalorder %s27, 0
      %p332 = por %p330, %p331
      %p333 = scmp.le.s32.totalorder 1, %s21
      %p334 = scmp.lt.s32.totalorder %s21, 3
      %p335 = pnand %p333, %p334
      %p336 = pneg %p335
      // Predicated region
      $region9: #{tpu_custom_call.1} parent=5 // pred_check
        _
      $region10: #{tpu_custom_call.1} parent=5 // pred_check_branch
        %338 = sbr.rel (%p335) target = $region12
      $region11: #{tpu_custom_call.1} parent=5 // pred_region
        %s339 = ssub.s32 %s21, 1
        // Predicated region
        $region13: #{tpu_custom_call.1} parent=11 // pred_check
          %p340 = pneg %p68
        $region14: #{tpu_custom_call.1} parent=11 // pred_check_branch
          %342 = sbr.rel (%p340) target = $region16
        $region15: #{tpu_custom_call.1} parent=11 // pred_region
          _
        $region16: #{tpu_custom_call.1} parent=11 // pred_fallthru
          _
        // Predicated region
        $region17: #{tpu_custom_call.1} parent=11 // pred_check
          %p343 = pneg %p89
        $region18: #{tpu_custom_call.1} parent=11 // pred_check_branch
          %345 = sbr.rel (%p343) target = $region20
        $region19: #{tpu_custom_call.1} parent=11 // pred_region
          _
        $region20: #{tpu_custom_call.1} parent=11 // pred_fallthru
          _
        // Predicated region
        $region21: #{tpu_custom_call.1} parent=11 // pred_check
          %p346 = pneg %p110
        $region22: #{tpu_custom_call.1} parent=11 // pred_check_branch
          %348 = sbr.rel (%p346) target = $region24
        $region23: #{tpu_custom_call.1} parent=11 // pred_region
          _
        $region24: #{tpu_custom_call.1} parent=11 // pred_fallthru
          _
        // Predicated region
        $region25: #{tpu_custom_call.1} parent=11 // pred_check
          %p349 = pneg %p131
        $region26: #{tpu_custom_call.1} parent=11 // pred_check_branch
          %351 = sbr.rel (%p349) target = $region28
        $region27: #{tpu_custom_call.1} parent=11 // pred_region
          %s353 = ssub.s32 1536, 1536
          %354 = vsyncadd [#allocation3], %s353
          %s355 = sshll.u32 [#allocation2], 4
          %s356 = int_to_ptr.vmem [resolvable:$true] %s355
          %361 = dma.hbm_to_vmem [thread:$0]  %s4, 1536, %s356, [#allocation3], 128, 128, 8
        $region28: #{tpu_custom_call.1} parent=11 // pred_fallthru
          _
        // Predicated region
        $region29: #{tpu_custom_call.1} parent=11 // pred_check
          %p362 = pneg %p152
        $region30: #{tpu_custom_call.1} parent=11 // pred_check_branch
          %364 = sbr.rel (%p362) target = $region32
        $region31: #{tpu_custom_call.1} parent=11 // pred_region
          _
        $region32: #{tpu_custom_call.1} parent=11 // pred_fallthru
          _
        // Predicated region
        $region33: #{tpu_custom_call.1} parent=11 // pred_check
          %p365 = pneg %p173
        $region34: #{tpu_custom_call.1} parent=11 // pred_check_branch
          %367 = sbr.rel (%p365) target = $region36
        $region35: #{tpu_custom_call.1} parent=11 // pred_region
          %s369 = ssub.s32 1152, 1152
          %370 = vsyncadd [#allocation5], %s369
          %s371 = sshll.u32 [#allocation4], 4
          %s372 = int_to_ptr.vmem [resolvable:$true] %s371
          %377 = dma.hbm_to_vmem [thread:$0]  %s6, 1152, %s372, [#allocation5], 128, 128, 8
        $region36: #{tpu_custom_call.1} parent=11 // pred_fallthru
          _
        // Predicated region
        $region37: #{tpu_custom_call.1} parent=11 // pred_check
          %p378 = pneg %p194
        $region38: #{tpu_custom_call.1} parent=11 // pred_check_branch
          %380 = sbr.rel (%p378) target = $region40
        $region39: #{tpu_custom_call.1} parent=11 // pred_region
          %s382 = ssub.s32 1536, 1536
          %383 = vsyncadd [#allocation5], %s382
          %s384 = sshll.u32 [#allocation6], 4
          %s385 = int_to_ptr.vmem [resolvable:$true] %s384
          %390 = dma.hbm_to_vmem [thread:$0]  %s7, 1536, %s385, [#allocation5], 128, 128, 8
        $region40: #{tpu_custom_call.1} parent=11 // pred_fallthru
          _
        // Predicated region
        $region41: #{tpu_custom_call.1} parent=11 // pred_check
          %p391 = pneg %p215
        $region42: #{tpu_custom_call.1} parent=11 // pred_check_branch
          %393 = sbr.rel (%p391) target = $region44
        $region43: #{tpu_custom_call.1} parent=11 // pred_region
          _
        $region44: #{tpu_custom_call.1} parent=11 // pred_fallthru
          _
        // Predicated region
        $region45: #{tpu_custom_call.1} parent=11 // pred_check
          %p394 = pneg %p236
        $region46: #{tpu_custom_call.1} parent=11 // pred_check_branch
          %396 = sbr.rel (%p394) target = $region48
        $region47: #{tpu_custom_call.1} parent=11 // pred_region
          _
        $region48: #{tpu_custom_call.1} parent=11 // pred_fallthru
          _
        // Predicated region
        $region49: #{tpu_custom_call.1} parent=11 // pred_check
          %p397 = pneg %p257
        $region50: #{tpu_custom_call.1} parent=11 // pred_check_branch
          %399 = sbr.rel (%p397) target = $region52
        $region51: #{tpu_custom_call.1} parent=11 // pred_region
          _
        $region52: #{tpu_custom_call.1} parent=11 // pred_fallthru
          _
        // Predicated region
        $region53: #{tpu_custom_call.1} parent=11 // pred_check
          %p400 = pneg %p278
        $region54: #{tpu_custom_call.1} parent=11 // pred_check_branch
          %402 = sbr.rel (%p400) target = $region56
        $region55: #{tpu_custom_call.1} parent=11 // pred_region
          _
        $region56: #{tpu_custom_call.1} parent=11 // pred_fallthru
          _
        // Predicated region
        $region57: #{tpu_custom_call.1} parent=11 // pred_check
          %p403 = pneg %p299
        $region58: #{tpu_custom_call.1} parent=11 // pred_check_branch
          %405 = sbr.rel (%p403) target = $region60
        $region59: #{tpu_custom_call.1} parent=11 // pred_region
          _
        $region60: #{tpu_custom_call.1} parent=11 // pred_fallthru
          _
      $region12: #{tpu_custom_call.1} parent=5 // pred_fallthru
        _
      %p406 = scmp.lt.s32.totalorder %s21, 2
      // Predicated region
      $region61: #{tpu_custom_call.1} parent=5 // pred_check
        %p407 = pneg %p406
      $region62: #{tpu_custom_call.1} parent=5 // pred_check_branch
        %409 = sbr.rel (%p407) target = $region64
      $region63: #{tpu_custom_call.1} parent=5 // pred_region
        // Predicated region
        $region65: #{tpu_custom_call.1} parent=63 // pred_check
          %p410 = pneg %p41
        $region66: #{tpu_custom_call.1} parent=63 // pred_check_branch
          %412 = sbr.rel (%p410) target = $region68
        $region67: #{tpu_custom_call.1} parent=63 // pred_region
          %p413 = scmp.lt.s32.totalorder %s21, 1
          %s414 = scalar_select %p413, %s21, 1
          %s415 = smul.addr %s414, 10
          %s416 = smul.addr %s415, 8
          %s417 = scalar_lea.vmem %s0, %s416
        $region68: #{tpu_custom_call.1} parent=63 // pred_fallthru
          _
      $region64: #{tpu_custom_call.1} parent=5 // pred_fallthru
        _
      %p418 = scmp.le.s32.totalorder 1, %s21
      %p419 = scmp.lt.s32.totalorder %s21, 3
      %p420 = pnand %p418, %p419
      %p421 = pneg %p420
      // Predicated region
      $region69: #{tpu_custom_call.1} parent=5 // pred_check
        _
      $region70: #{tpu_custom_call.1} parent=5 // pred_check_branch
        %423 = sbr.rel (%p420) target = $region72
      $region71: #{tpu_custom_call.1} parent=5 // pred_region
        %s424 = ssub.s32 %s21, 1
        // Predicated region
        $region73: #{tpu_custom_call.1} parent=71 // pred_check
          %p425 = pneg %p131
        $region74: #{tpu_custom_call.1} parent=71 // pred_check_branch
          %427 = sbr.rel (%p425) target = $region76
        $region75: #{tpu_custom_call.1} parent=71 // pred_region
          %428 = dma.done [#allocation3], 1536
        $region76: #{tpu_custom_call.1} parent=71 // pred_fallthru
          _
        // Predicated region
        $region77: #{tpu_custom_call.1} parent=71 // pred_check
          %p429 = pneg %p173
        $region78: #{tpu_custom_call.1} parent=71 // pred_check_branch
          %431 = sbr.rel (%p429) target = $region80
        $region79: #{tpu_custom_call.1} parent=71 // pred_region
          %432 = dma.done [#allocation5], 1152
        $region80: #{tpu_custom_call.1} parent=71 // pred_fallthru
          _
        // Predicated region
        $region81: #{tpu_custom_call.1} parent=71 // pred_check
          %p433 = pneg %p194
        $region82: #{tpu_custom_call.1} parent=71 // pred_check_branch
          %435 = sbr.rel (%p433) target = $region84
        $region83: #{tpu_custom_call.1} parent=71 // pred_region
          %436 = dma.done [#allocation5], 1536
        $region84: #{tpu_custom_call.1} parent=71 // pred_fallthru
          _
        %p437 = scmp.lt.s32.totalorder %s26, 1
        %s438 = scalar_select %p437, %s26, 1
        %s439 = smul.addr %s438, 10
        %s440 = smul.addr %s439, 8
        %s441 = scalar_lea.vmem %s0, %s440
        %p442 = pneg %p47
        %p443 = pneg %p44
        %p444 = pneg %p68
        %p445 = pneg %p65
        %p446 = pneg %p89
        %p447 = pneg %p86
        %p448 = pneg %p110
        %p449 = pneg %p107
        %p450 = pneg %p131
        %p451 = pneg %p128
        %p452 = pneg %p152
        %p453 = pneg %p149
        %p454 = pneg %p173
        %p455 = pneg %p170
        %p456 = pneg %p194
        %p457 = pneg %p191
        %p458 = pneg %p215
        %p459 = pneg %p212
        %p460 = pneg %p236
        %p461 = pneg %p233
        %p462 = pneg %p257
        %p463 = pneg %p254
        %p464 = pneg %p278
        %p465 = pneg %p275
        %p466 = pneg %p299
        %p467 = pneg %p296
        %p468 = pneg %p325
        %p469 = pneg %p322
        %p470 = scmp.lt.s32.totalorder %s26, 1
        %s471 = scalar_select %p470, %s26, 1
        %s472 = smul.addr %s471, 3
        %s473 = smul.addr %s472, 8
        %s474 = scalar_lea.vmem %s13, %s473
        %p475 = scmp.lt.s32.totalorder %s26, 1
        %s476 = scalar_select %p475, %s26, 1
        %s477 = smul.addr %s476, 10
        %s478 = smul.addr %s477, 8
        %s479 = scalar_lea.vmem %s0, %s478
        %p480 = scmp.lt.s32.totalorder %s26, 1
        %s481 = scalar_select %p480, %s26, 1
        %s482 = smul.addr %s481, 3
        %s483 = smul.addr %s482, 8
        %s484 = scalar_lea.vmem %s13, %s483
        %v485 = vld [vmem:[%s479] sm:$0xff]
        %v486 = vld [vmem:[%s479 + $0x8] sm:$0xff]
        %v487 = vld [vmem:[%s479 + $0x10] sm:$0xff]
        %v488 = vld [vmem:[%s479 + $0x18] sm:$0xff]
        %v489 = vld [vmem:[%s479 + $0x20] sm:$0xff]
        %v490 = vld [vmem:[%s479 + $0x28] sm:$0xff]
        %v491 = vld [vmem:[%s479 + $0x30] sm:$0xff]
        %v492 = vld [vmem:[%s479 + $0x38] sm:$0xff]
        %v493 = vld [vmem:[%s479 + $0x40] sm:$0xff]
        %v494 = vld [vmem:[%s479 + $0x48] sm:$0x7f]
        %v495 = vld [vmem:[%s1] sm:$0xff]
        %v496 = vld [vmem:[%s1 + $0x8] sm:$0x3]
        %v497 = vld [vmem:[%s2] sm:$0x1]
        %v499 = vlaneseq
        %v500 = vshrl.u32 %v499, 7
        %v501 = vsub.s32 0, %v500
        %v502 = vrot.slane %v497, %v501
        %vm504 = vcmask 80896
        %v506 = vsel %vm504, %v485, 0
        %v509 = vsel %vm504, %v486, 0
        %v512 = vsel %vm504, %v487, 0
        %v515 = vsel %vm504, %v488, 0
        %v518 = vsel %vm504, %v489, 0
        %v521 = vsel %vm504, %v490, 0
        %v524 = vsel %vm504, %v491, 0
        %v527 = vsel %vm504, %v492, 0
        %v530 = vsel %vm504, %v493, 0
        %v533 = vsel %vm504, %v494, 0
        %vm535 = vcmask 1041408
        %v537 = vsel %vm535, %v496, 0
        %539 = vmatprep.subr.mxu0 0.0
        %540 = vmatpush1.msra.mxu0 0.0
        %541 = vmatprep.subr.mxu0 0.0
        %542 = vmatpush1.msra.mxu0 0.0
        %543 = vmatprep.subr.mxu0 0.0
        %544 = vmatpush1.msra.mxu0 0.0
        %545 = vmatprep.subr.mxu0 0.0
        %546 = vmatpush1.msra.mxu0 0.0
        %547 = vmatprep.subr.mxu0 0.0
        %548 = vmatpush1.msra.mxu0 0.0
        %549 = vmatprep.subr.mxu0 0.0
        %550 = vmatpush1.msra.mxu0 0.0
        %551 = vmatprep.subr.mxu0 0.0
        %552 = vmatpush1.msra.mxu0 0.0
        %553 = vmatprep.subr.mxu0 0.0
        %554 = vmatpush1.msra.mxu0 0.0
        %555 = vmatprep.subr.mxu0 0.0
        %556 = vmatpush1.msra.mxu0 0.0
        %557 = vmatprep.subr.mxu0 0.0
        %558 = vmatpush1.msra.mxu0 0.0
        %559 = vmatprep.subr.mxu0 0.0
        %560 = vmatpush1.msra.mxu0 0.0
        %561 = vmatprep.subr.mxu0 0.0
        %562 = vmatpush1.msra.mxu0 0.0
        %563 = vmatprep.subr.mxu0 0.0
        %564 = vmatpush1.msra.mxu0 0.0
        %565 = vmatprep.subr.mxu0 0.0
        %566 = vmatpush1.msra.mxu0 0.0
        %567 = vmatprep.subr.mxu0 0.0
        %568 = vmatpush1.msra.mxu0 %v537
        %569 = vmatprep.subr.mxu0 0.0
        %570 = vmatpush1.msra.mxu0 %v495
        %571 = vmatprep.subr.mxu0 0.0
        %572 = vmatpush2.msra.mxu0 0.0
        %573 = vmatprep.subr.mxu0 0.0
        %574 = vmatpush2.msra.mxu0 0.0
        %575 = vmatprep.subr.mxu0 0.0
        %576 = vmatpush2.msra.mxu0 0.0
        %577 = vmatprep.subr.mxu0 0.0
        %578 = vmatpush2.msra.mxu0 0.0
        %579 = vmatprep.subr.mxu0 0.0
        %580 = vmatpush2.msra.mxu0 0.0
        %581 = vmatprep.subr.mxu0 0.0
        %582 = vmatpush2.msra.mxu0 0.0
        %583 = vmatprep.subr.mxu0 0.0
        %584 = vmatpush2.msra.mxu0 0.0
        %585 = vmatprep.subr.mxu0 0.0
        %586 = vmatpush2.msra.mxu0 0.0
        %587 = vmatprep.subr.mxu0 0.0
        %588 = vmatpush2.msra.mxu0 0.0
        %589 = vmatprep.subr.mxu0 0.0
        %590 = vmatpush2.msra.mxu0 0.0
        %591 = vmatprep.subr.mxu0 0.0
        %592 = vmatpush2.msra.mxu0 0.0
        %593 = vmatprep.subr.mxu0 0.0
        %594 = vmatpush2.msra.mxu0 0.0
        %595 = vmatprep.subr.mxu0 0.0
        %596 = vmatpush2.msra.mxu0 0.0
        %597 = vmatprep.subr.mxu0 0.0
        %598 = vmatpush2.msra.mxu0 0.0
        %599 = vmatprep.subr.mxu0 0.0
        %600 = vmatpush2.msra.mxu0 0.0
        %601 = vmatprep.subr.mxu0 0.0
        %602 = vmatpush2.msra.mxu0 0.0
        %603 = vmatprep.mubr.f32.mxu0 0.0
        %604 = vmatmul.mubr.f32.gmra.mxu0 %v506
        %v605 = vpop.f32.mrf.mxu0
        %v606 = vadd.f32 %v502, %v605
        %v607 = vpop.f32.mrf.mxu0
        %608 = vmatprep.mubr.f32.mxu0 0.0
        %609 = vmatmul.mubr.f32.gmra.mxu0 %v509
        %v610 = vpop.f32.mrf.mxu0
        %v611 = vadd.f32 %v502, %v610
        %v612 = vpop.f32.mrf.mxu0
        %613 = vmatprep.mubr.f32.mxu0 0.0
        %614 = vmatmul.mubr.f32.gmra.mxu0 %v512
        %v615 = vpop.f32.mrf.mxu0
        %v616 = vadd.f32 %v502, %v615
        %v617 = vpop.f32.mrf.mxu0
        %618 = vmatprep.mubr.f32.mxu0 0.0
        %619 = vmatmul.mubr.f32.gmra.mxu0 %v515
        %v620 = vpop.f32.mrf.mxu0
        %v621 = vadd.f32 %v502, %v620
        %v622 = vpop.f32.mrf.mxu0
        %623 = vmatprep.mubr.f32.mxu0 0.0
        %624 = vmatmul.mubr.f32.gmra.mxu0 %v518
        %v625 = vpop.f32.mrf.mxu0
        %v626 = vadd.f32 %v502, %v625
        %v627 = vpop.f32.mrf.mxu0
        %628 = vmatprep.mubr.f32.mxu0 0.0
        %629 = vmatmul.mubr.f32.gmra.mxu0 %v521
        %v630 = vpop.f32.mrf.mxu0
        %v631 = vadd.f32 %v502, %v630
        %v632 = vpop.f32.mrf.mxu0
        %633 = vmatprep.mubr.f32.mxu0 0.0
        %634 = vmatmul.mubr.f32.gmra.mxu0 %v524
        %v635 = vpop.f32.mrf.mxu0
        %v636 = vadd.f32 %v502, %v635
        %v637 = vpop.f32.mrf.mxu0
        %638 = vmatprep.mubr.f32.mxu0 0.0
        %639 = vmatmul.mubr.f32.gmra.mxu0 %v527
        %v640 = vpop.f32.mrf.mxu0
        %v641 = vadd.f32 %v502, %v640
        %v642 = vpop.f32.mrf.mxu0
        %643 = vmatprep.mubr.f32.mxu0 0.0
        %644 = vmatmul.mubr.f32.gmra.mxu0 %v530
        %v645 = vpop.f32.mrf.mxu0
        %v646 = vadd.f32 %v502, %v645
        %v647 = vpop.f32.mrf.mxu0
        %648 = vmatprep.mubr.f32.mxu0 0.0
        %649 = vmatmul.mubr.f32.gmra.mxu0 %v533
        %v650 = vpop.f32.mrf.mxu0
        %v651 = vadd.f32 %v502, %v650
        %v652 = vpop.f32.mrf.mxu0
        %653 = vdwg.mxu0
        %v654 = vmul.f32 %v606, %v606
        %v655 = vmul.f32 %v611, %v611
        %v656 = vmul.f32 %v616, %v616
        %v657 = vmul.f32 %v621, %v621
        %v658 = vmul.f32 %v626, %v626
        %v659 = vmul.f32 %v631, %v631
        %v660 = vmul.f32 %v636, %v636
        %v661 = vmul.f32 %v641, %v641
        %v662 = vmul.f32 %v646, %v646
        %v663 = vmul.f32 %v651, %v651
        %v664 = vmul.f32 %v606, %v654
        %v665 = vmul.f32 %v611, %v655
        %v666 = vmul.f32 %v616, %v656
        %v667 = vmul.f32 %v621, %v657
        %v668 = vmul.f32 %v626, %v658
        %v669 = vmul.f32 %v631, %v659
        %v670 = vmul.f32 %v636, %v660
        %v671 = vmul.f32 %v641, %v661
        %v672 = vmul.f32 %v646, %v662
        %v673 = vmul.f32 %v651, %v663
        %v674 = vmul.f32 %v664, 0.044715
        %v675 = vmul.f32 %v665, 0.044715
        %v676 = vmul.f32 %v666, 0.044715
        %v677 = vmul.f32 %v667, 0.044715
        %v678 = vmul.f32 %v668, 0.044715
        %v679 = vmul.f32 %v669, 0.044715
        %v680 = vmul.f32 %v670, 0.044715
        %v681 = vmul.f32 %v671, 0.044715
        %v682 = vmul.f32 %v672, 0.044715
        %v683 = vmul.f32 %v673, 0.044715
        %v684 = vadd.f32 %v606, %v674
        %v685 = vadd.f32 %v611, %v675
        %v686 = vadd.f32 %v616, %v676
        %v687 = vadd.f32 %v621, %v677
        %v688 = vadd.f32 %v626, %v678
        %v689 = vadd.f32 %v631, %v679
        %v690 = vadd.f32 %v636, %v680
        %v691 = vadd.f32 %v641, %v681
        %v692 = vadd.f32 %v646, %v682
        %v693 = vadd.f32 %v651, %v683
        %v694 = vmul.f32 %v684, 0.7978846
        %v695 = vmul.f32 %v685, 0.7978846
        %v696 = vmul.f32 %v686, 0.7978846
        %v697 = vmul.f32 %v687, 0.7978846
        %v698 = vmul.f32 %v688, 0.7978846
        %v699 = vmul.f32 %v689, 0.7978846
        %v700 = vmul.f32 %v690, 0.7978846
        %v701 = vmul.f32 %v691, 0.7978846
        %v702 = vmul.f32 %v692, 0.7978846
        %v703 = vmul.f32 %v693, 0.7978846
        %v704 = vtanh.pop %v694
        %v705 = vtanh.pop %v695
        %v706 = vtanh.pop %v696
        %v707 = vtanh.pop %v697
        %v708 = vtanh.pop %v698
        %v709 = vtanh.pop %v699
        %v710 = vtanh.pop %v700
        %v711 = vtanh.pop %v701
        %v712 = vtanh.pop %v702
        %v713 = vtanh.pop %v703
        %v714 = vadd.f32 %v704, 1.0
        %v715 = vadd.f32 %v705, 1.0
        %v716 = vadd.f32 %v706, 1.0
        %v717 = vadd.f32 %v707, 1.0
        %v718 = vadd.f32 %v708, 1.0
        %v719 = vadd.f32 %v709, 1.0
        %v720 = vadd.f32 %v710, 1.0
        %v721 = vadd.f32 %v711, 1.0
        %v722 = vadd.f32 %v712, 1.0
        %v723 = vadd.f32 %v713, 1.0
        %v724 = vmul.f32 %v714, 0.5
        %v725 = vmul.f32 %v715, 0.5
        %v726 = vmul.f32 %v716, 0.5
        %v727 = vmul.f32 %v717, 0.5
        %v728 = vmul.f32 %v718, 0.5
        %v729 = vmul.f32 %v719, 0.5
        %v730 = vmul.f32 %v720, 0.5
        %v731 = vmul.f32 %v721, 0.5
        %v732 = vmul.f32 %v722, 0.5
        %v733 = vmul.f32 %v723, 0.5
        %v734 = vmul.f32 %v606, %v724
        %v735 = vmul.f32 %v611, %v725
        %v736 = vmul.f32 %v616, %v726
        %v737 = vmul.f32 %v621, %v727
        %v738 = vmul.f32 %v626, %v728
        %v739 = vmul.f32 %v631, %v729
        %v740 = vmul.f32 %v636, %v730
        %v741 = vmul.f32 %v641, %v731
        %v742 = vmul.f32 %v646, %v732
        %v743 = vmul.f32 %v651, %v733
        %v744 = vld [vmem:[%s3] sm:$0xff]
        %v745 = vld [vmem:[%s3 + $0x8] sm:$0xff]
        %v746 = vld [vmem:[%s3 + $0x10] sm:$0xff]
        %v747 = vld [vmem:[%s3 + $0x18] sm:$0xff]
        %v748 = vld [vmem:[%s3 + $0x20] sm:$0x7f]
        %vm749 = vcmask 646144
        %v751 = vsel %vm749, %v744, 0
        %v754 = vsel %vm749, %v745, 0
        %v757 = vsel %vm749, %v746, 0
        %v760 = vsel %vm749, %v747, 0
        %v763 = vsel %vm749, %v748, 0
        %vm765 = vcmask 1046528
        %v767 = vsel %vm765, %v743, 0
        %769 = vmatprep.subr.mxu0 0.0
        %770 = vmatpush1.msra.mxu0 0.0
        %771 = vmatprep.subr.mxu0 0.0
        %772 = vmatpush1.msra.mxu0 0.0
        %773 = vmatprep.subr.mxu0 0.0
        %774 = vmatpush1.msra.mxu0 0.0
        %775 = vmatprep.subr.mxu0 0.0
        %776 = vmatpush1.msra.mxu0 0.0
        %777 = vmatprep.subr.mxu0 0.0
        %778 = vmatpush1.msra.mxu0 0.0
        %779 = vmatprep.subr.mxu0 0.0
        %780 = vmatpush1.msra.mxu0 0.0
        %781 = vmatprep.subr.mxu0 0.0
        %782 = vmatpush1.msra.mxu0 %v767
        %783 = vmatprep.subr.mxu0 0.0
        %784 = vmatpush1.msra.mxu0 %v742
        %785 = vmatprep.subr.mxu0 0.0
        %786 = vmatpush1.msra.mxu0 %v741
        %787 = vmatprep.subr.mxu0 0.0
        %788 = vmatpush1.msra.mxu0 %v740
        %789 = vmatprep.subr.mxu0 0.0
        %790 = vmatpush1.msra.mxu0 %v739
        %791 = vmatprep.subr.mxu0 0.0
        %792 = vmatpush1.msra.mxu0 %v738
        %793 = vmatprep.subr.mxu0 0.0
        %794 = vmatpush1.msra.mxu0 %v737
        %795 = vmatprep.subr.mxu0 0.0
        %796 = vmatpush1.msra.mxu0 %v736
        %797 = vmatprep.subr.mxu0 0.0
        %798 = vmatpush1.msra.mxu0 %v735
        %799 = vmatprep.subr.mxu0 0.0
        %800 = vmatpush1.msra.mxu0 %v734
        %801 = vmatprep.subr.mxu0 0.0
        %802 = vmatpush2.msra.mxu0 0.0
        %803 = vmatprep.subr.mxu0 0.0
        %804 = vmatpush2.msra.mxu0 0.0
        %805 = vmatprep.subr.mxu0 0.0
        %806 = vmatpush2.msra.mxu0 0.0
        %807 = vmatprep.subr.mxu0 0.0
        %808 = vmatpush2.msra.mxu0 0.0
        %809 = vmatprep.subr.mxu0 0.0
        %810 = vmatpush2.msra.mxu0 0.0
        %811 = vmatprep.subr.mxu0 0.0
        %812 = vmatpush2.msra.mxu0 0.0
        %813 = vmatprep.subr.mxu0 0.0
        %814 = vmatpush2.msra.mxu0 0.0
        %815 = vmatprep.subr.mxu0 0.0
        %816 = vmatpush2.msra.mxu0 0.0
        %817 = vmatprep.subr.mxu0 0.0
        %818 = vmatpush2.msra.mxu0 0.0
        %819 = vmatprep.subr.mxu0 0.0
        %820 = vmatpush2.msra.mxu0 0.0
        %821 = vmatprep.subr.mxu0 0.0
        %822 = vmatpush2.msra.mxu0 0.0
        %823 = vmatprep.subr.mxu0 0.0
        %824 = vmatpush2.msra.mxu0 0.0
        %825 = vmatprep.subr.mxu0 0.0
        %826 = vmatpush2.msra.mxu0 0.0
        %827 = vmatprep.subr.mxu0 0.0
        %828 = vmatpush2.msra.mxu0 0.0
        %829 = vmatprep.subr.mxu0 0.0
        %830 = vmatpush2.msra.mxu0 0.0
        %831 = vmatprep.subr.mxu0 0.0
        %832 = vmatpush2.msra.mxu0 0.0
        %833 = vmatprep.mubr.f32.mxu0 0.0
        %834 = vmatmul.mubr.f32.gmra.mxu0 %v751
        %v835 = vpop.f32.mrf.mxu0
        %v836 = vadd.f32 0.0, %v835
        %v837 = vpop.f32.mrf.mxu0
        %838 = vmatprep.mubr.f32.mxu0 0.0
        %839 = vmatmul.mubr.f32.gmra.mxu0 %v754
        %v840 = vpop.f32.mrf.mxu0
        %v841 = vadd.f32 0.0, %v840
        %v842 = vpop.f32.mrf.mxu0
        %843 = vmatprep.mubr.f32.mxu0 0.0
        %844 = vmatmul.mubr.f32.gmra.mxu0 %v757
        %v845 = vpop.f32.mrf.mxu0
        %v846 = vadd.f32 0.0, %v845
        %v847 = vpop.f32.mrf.mxu0
        %848 = vmatprep.mubr.f32.mxu0 0.0
        %849 = vmatmul.mubr.f32.gmra.mxu0 %v760
        %v850 = vpop.f32.mrf.mxu0
        %v851 = vadd.f32 0.0, %v850
        %v852 = vpop.f32.mrf.mxu0
        %853 = vmatprep.mubr.f32.mxu0 0.0
        %854 = vmatmul.mubr.f32.gmra.mxu0 %v763
        %v855 = vpop.f32.mrf.mxu0
        %v856 = vadd.f32 0.0, %v855
        %v857 = vpop.f32.mrf.mxu0
        %858 = vdwg.mxu0
        %v859 = vld [vmem:[#allocation2] sm:$0xff]
        %v860 = vld [vmem:[#allocation2 + $0x8] sm:$0xff]
        %v861 = vld [vmem:[#allocation2 + $0x10] sm:$0xff]
        %v862 = vld [vmem:[#allocation2 + $0x18] sm:$0xff]
        %s863 = scalar_lea.vmem %s3, 40
        %v864 = vld [vmem:[%s863] sm:$0xff]
        %v865 = vld [vmem:[%s863 + $0x8] sm:$0xff]
        %v866 = vld [vmem:[%s863 + $0x10] sm:$0xff]
        %v867 = vld [vmem:[%s863 + $0x18] sm:$0xff]
        %v868 = vld [vmem:[%s863 + $0x20] sm:$0x7f]
        %v870 = vsel %vm749, %v864, 0
        %v873 = vsel %vm749, %v865, 0
        %v876 = vsel %vm749, %v866, 0
        %v879 = vsel %vm749, %v867, 0
        %v882 = vsel %vm749, %v868, 0
        %884 = vmatprep.subr.mxu0 0.0
        %885 = vmatpush1.msra.mxu0 0.0
        %886 = vmatprep.subr.mxu0 0.0
        %887 = vmatpush1.msra.mxu0 0.0
        %888 = vmatprep.subr.mxu0 0.0
        %889 = vmatpush1.msra.mxu0 0.0
        %890 = vmatprep.subr.mxu0 0.0
        %891 = vmatpush1.msra.mxu0 0.0
        %892 = vmatprep.subr.mxu0 0.0
        %893 = vmatpush1.msra.mxu0 0.0
        %894 = vmatprep.subr.mxu0 0.0
        %895 = vmatpush1.msra.mxu0 0.0
        %896 = vmatprep.subr.mxu0 0.0
        %897 = vmatpush1.msra.mxu0 %v767
        %898 = vmatprep.subr.mxu0 0.0
        %899 = vmatpush1.msra.mxu0 %v742
        %900 = vmatprep.subr.mxu0 0.0
        %901 = vmatpush1.msra.mxu0 %v741
        %902 = vmatprep.subr.mxu0 0.0
        %903 = vmatpush1.msra.mxu0 %v740
        %904 = vmatprep.subr.mxu0 0.0
        %905 = vmatpush1.msra.mxu0 %v739
        %906 = vmatprep.subr.mxu0 0.0
        %907 = vmatpush1.msra.mxu0 %v738
        %908 = vmatprep.subr.mxu0 0.0
        %909 = vmatpush1.msra.mxu0 %v737
        %910 = vmatprep.subr.mxu0 0.0
        %911 = vmatpush1.msra.mxu0 %v736
        %912 = vmatprep.subr.mxu0 0.0
        %913 = vmatpush1.msra.mxu0 %v735
        %914 = vmatprep.subr.mxu0 0.0
        %915 = vmatpush1.msra.mxu0 %v734
        %916 = vmatprep.subr.mxu0 0.0
        %917 = vmatpush2.msra.mxu0 0.0
        %918 = vmatprep.subr.mxu0 0.0
        %919 = vmatpush2.msra.mxu0 0.0
        %920 = vmatprep.subr.mxu0 0.0
        %921 = vmatpush2.msra.mxu0 0.0
        %922 = vmatprep.subr.mxu0 0.0
        %923 = vmatpush2.msra.mxu0 0.0
        %924 = vmatprep.subr.mxu0 0.0
        %925 = vmatpush2.msra.mxu0 0.0
        %926 = vmatprep.subr.mxu0 0.0
        %927 = vmatpush2.msra.mxu0 0.0
        %928 = vmatprep.subr.mxu0 0.0
        %929 = vmatpush2.msra.mxu0 0.0
        %930 = vmatprep.subr.mxu0 0.0
        %931 = vmatpush2.msra.mxu0 0.0
        %932 = vmatprep.subr.mxu0 0.0
        %933 = vmatpush2.msra.mxu0 0.0
        %934 = vmatprep.subr.mxu0 0.0
        %935 = vmatpush2.msra.mxu0 0.0
        %936 = vmatprep.subr.mxu0 0.0
        %937 = vmatpush2.msra.mxu0 0.0
        %938 = vmatprep.subr.mxu0 0.0
        %939 = vmatpush2.msra.mxu0 0.0
        %940 = vmatprep.subr.mxu0 0.0
        %941 = vmatpush2.msra.mxu0 0.0
        %942 = vmatprep.subr.mxu0 0.0
        %943 = vmatpush2.msra.mxu0 0.0
        %944 = vmatprep.subr.mxu0 0.0
        %945 = vmatpush2.msra.mxu0 0.0
        %946 = vmatprep.subr.mxu0 0.0
        %947 = vmatpush2.msra.mxu0 0.0
        %948 = vmatprep.mubr.f32.mxu0 0.0
        %949 = vmatmul.mubr.f32.gmra.mxu0 %v870
        %v950 = vpop.f32.mrf.mxu0
        %v951 = vadd.f32 0.0, %v950
        %v952 = vpop.f32.mrf.mxu0
        %953 = vmatprep.mubr.f32.mxu0 0.0
        %954 = vmatmul.mubr.f32.gmra.mxu0 %v873
        %v955 = vpop.f32.mrf.mxu0
        %v956 = vadd.f32 0.0, %v955
        %v957 = vpop.f32.mrf.mxu0
        %958 = vmatprep.mubr.f32.mxu0 0.0
        %959 = vmatmul.mubr.f32.gmra.mxu0 %v876
        %v960 = vpop.f32.mrf.mxu0
        %v961 = vadd.f32 0.0, %v960
        %v962 = vpop.f32.mrf.mxu0
        %963 = vmatprep.mubr.f32.mxu0 0.0
        %964 = vmatmul.mubr.f32.gmra.mxu0 %v879
        %v965 = vpop.f32.mrf.mxu0
        %v966 = vadd.f32 0.0, %v965
        %v967 = vpop.f32.mrf.mxu0
        %968 = vmatprep.mubr.f32.mxu0 0.0
        %969 = vmatmul.mubr.f32.gmra.mxu0 %v882
        %v970 = vpop.f32.mrf.mxu0
        %v971 = vadd.f32 0.0, %v970
        %v972 = vpop.f32.mrf.mxu0
        %973 = vdwg.mxu0
        %s974 = scalar_lea.vmem [#allocation2], 32
        %v975 = vld [vmem:[%s974] sm:$0xff]
        %v976 = vld [vmem:[%s974 + $0x8] sm:$0xff]
        %v977 = vld [vmem:[%s974 + $0x10] sm:$0xff]
        %v978 = vld [vmem:[%s974 + $0x18] sm:$0xff]
        %vm979 = vcmask 261120
        %v981 = vsel %vm979, %v951, 0
        %v984 = vsel %vm979, %v956, 0
        %v987 = vsel %vm979, %v961, 0
        %v990 = vsel %vm979, %v966, 0
        %v993 = vsel %vm979, %v971, 0
        %995 = vmatprep.subr.mxu0 0.0
        %996 = vmatpush1.msra.mxu0 0.0
        %997 = vmatprep.subr.mxu0 0.0
        %998 = vmatpush1.msra.mxu0 0.0
        %999 = vmatprep.subr.mxu0 0.0
        %1000 = vmatpush1.msra.mxu0 0.0
        %1001 = vmatprep.subr.mxu0 0.0
        %1002 = vmatpush1.msra.mxu0 0.0
        %1003 = vmatprep.subr.mxu0 0.0
        %1004 = vmatpush1.msra.mxu0 0.0
        %1005 = vmatprep.subr.mxu0 0.0
        %1006 = vmatpush1.msra.mxu0 0.0
        %1007 = vmatprep.subr.mxu0 0.0
        %1008 = vmatpush1.msra.mxu0 0.0
        %1009 = vmatprep.subr.mxu0 0.0
        %1010 = vmatpush1.msra.mxu0 0.0
        %1011 = vmatprep.subr.mxu0 0.0
        %1012 = vmatpush1.msra.mxu0 0.0
        %1013 = vmatprep.subr.mxu0 0.0
        %1014 = vmatpush1.msra.mxu0 0.0
        %1015 = vmatprep.subr.mxu0 0.0
        %1016 = vmatpush1.msra.mxu0 0.0
        %1017 = vmatprep.subr.mxu0 0.0
        %1018 = vmatpush1.msra.mxu0 0.0
        %1019 = vmatprep.subr.mxu0 0.0
        %1020 = vmatpush1.msra.mxu0 %v978
        %1021 = vmatprep.subr.mxu0 0.0
        %1022 = vmatpush1.msra.mxu0 %v977
        %1023 = vmatprep.subr.mxu0 0.0
        %1024 = vmatpush1.msra.mxu0 %v976
        %1025 = vmatprep.subr.mxu0 0.0
        %1026 = vmatpush1.msra.mxu0 %v975
        %1027 = vmatprep.subr.mxu0 0.0
        %1028 = vmatpush2.msra.mxu0 0.0
        %1029 = vmatprep.subr.mxu0 0.0
        %1030 = vmatpush2.msra.mxu0 0.0
        %1031 = vmatprep.subr.mxu0 0.0
        %1032 = vmatpush2.msra.mxu0 0.0
        %1033 = vmatprep.subr.mxu0 0.0
        %1034 = vmatpush2.msra.mxu0 0.0
        %1035 = vmatprep.subr.mxu0 0.0
        %1036 = vmatpush2.msra.mxu0 0.0
        %1037 = vmatprep.subr.mxu0 0.0
        %1038 = vmatpush2.msra.mxu0 0.0
        %1039 = vmatprep.subr.mxu0 0.0
        %1040 = vmatpush2.msra.mxu0 0.0
        %1041 = vmatprep.subr.mxu0 0.0
        %1042 = vmatpush2.msra.mxu0 0.0
        %1043 = vmatprep.subr.mxu0 0.0
        %1044 = vmatpush2.msra.mxu0 0.0
        %1045 = vmatprep.subr.mxu0 0.0
        %1046 = vmatpush2.msra.mxu0 0.0
        %1047 = vmatprep.subr.mxu0 0.0
        %1048 = vmatpush2.msra.mxu0 0.0
        %1049 = vmatprep.subr.mxu0 0.0
        %1050 = vmatpush2.msra.mxu0 0.0
        %1051 = vmatprep.subr.mxu0 0.0
        %1052 = vmatpush2.msra.mxu0 0.0
        %1053 = vmatprep.subr.mxu0 0.0
        %1054 = vmatpush2.msra.mxu0 0.0
        %1055 = vmatprep.subr.mxu0 0.0
        %1056 = vmatpush2.msra.mxu0 0.0
        %1057 = vmatprep.subr.mxu0 0.0
        %1058 = vmatpush2.msra.mxu0 0.0
        %1059 = vmatprep.mubr.f32.mxu0 0.0
        %1060 = vmatmul.mubr.f32.gmra.mxu0 %v981
        %v1061 = vpop.f32.mrf.mxu0
        %v1062 = vadd.f32 0.0, %v1061
        %v1063 = vpop.f32.mrf.mxu0
        %1064 = vmatprep.mubr.f32.mxu0 0.0
        %1065 = vmatmul.mubr.f32.gmra.mxu0 %v984
        %v1066 = vpop.f32.mrf.mxu0
        %v1067 = vadd.f32 0.0, %v1066
        %v1068 = vpop.f32.mrf.mxu0
        %1069 = vmatprep.mubr.f32.mxu0 0.0
        %1070 = vmatmul.mubr.f32.gmra.mxu0 %v987
        %v1071 = vpop.f32.mrf.mxu0
        %v1072 = vadd.f32 0.0, %v1071
        %v1073 = vpop.f32.mrf.mxu0
        %1074 = vmatprep.mubr.f32.mxu0 0.0
        %1075 = vmatmul.mubr.f32.gmra.mxu0 %v990
        %v1076 = vpop.f32.mrf.mxu0
        %v1077 = vadd.f32 0.0, %v1076
        %v1078 = vpop.f32.mrf.mxu0
        %1079 = vmatprep.mubr.f32.mxu0 0.0
        %1080 = vmatmul.mubr.f32.gmra.mxu0 %v993
        %v1081 = vpop.f32.mrf.mxu0
        %v1082 = vadd.f32 0.0, %v1081
        %v1083 = vpop.f32.mrf.mxu0
        %1084 = vdwg.mxu0
        %v1086 = vsel %vm979, %v836, 0
        %v1089 = vsel %vm979, %v841, 0
        %v1092 = vsel %vm979, %v846, 0
        %v1095 = vsel %vm979, %v851, 0
        %v1098 = vsel %vm979, %v856, 0
        %1100 = vmatprep.subr.mxu0 0.0
        %1101 = vmatpush1.msra.mxu0 0.0
        %1102 = vmatprep.subr.mxu0 0.0
        %1103 = vmatpush1.msra.mxu0 0.0
        %1104 = vmatprep.subr.mxu0 0.0
        %1105 = vmatpush1.msra.mxu0 0.0
        %1106 = vmatprep.subr.mxu0 0.0
        %1107 = vmatpush1.msra.mxu0 0.0
        %1108 = vmatprep.subr.mxu0 0.0
        %1109 = vmatpush1.msra.mxu0 0.0
        %1110 = vmatprep.subr.mxu0 0.0
        %1111 = vmatpush1.msra.mxu0 0.0
        %1112 = vmatprep.subr.mxu0 0.0
        %1113 = vmatpush1.msra.mxu0 0.0
        %1114 = vmatprep.subr.mxu0 0.0
        %1115 = vmatpush1.msra.mxu0 0.0
        %1116 = vmatprep.subr.mxu0 0.0
        %1117 = vmatpush1.msra.mxu0 0.0
        %1118 = vmatprep.subr.mxu0 0.0
        %1119 = vmatpush1.msra.mxu0 0.0
        %1120 = vmatprep.subr.mxu0 0.0
        %1121 = vmatpush1.msra.mxu0 0.0
        %1122 = vmatprep.subr.mxu0 0.0
        %1123 = vmatpush1.msra.mxu0 0.0
        %1124 = vmatprep.subr.mxu0 0.0
        %1125 = vmatpush1.msra.mxu0 %v862
        %1126 = vmatprep.subr.mxu0 0.0
        %1127 = vmatpush1.msra.mxu0 %v861
        %1128 = vmatprep.subr.mxu0 0.0
        %1129 = vmatpush1.msra.mxu0 %v860
        %1130 = vmatprep.subr.mxu0 0.0
        %1131 = vmatpush1.msra.mxu0 %v859
        %1132 = vmatprep.subr.mxu0 0.0
        %1133 = vmatpush2.msra.mxu0 0.0
        %1134 = vmatprep.subr.mxu0 0.0
        %1135 = vmatpush2.msra.mxu0 0.0
        %1136 = vmatprep.subr.mxu0 0.0
        %1137 = vmatpush2.msra.mxu0 0.0
        %1138 = vmatprep.subr.mxu0 0.0
        %1139 = vmatpush2.msra.mxu0 0.0
        %1140 = vmatprep.subr.mxu0 0.0
        %1141 = vmatpush2.msra.mxu0 0.0
        %1142 = vmatprep.subr.mxu0 0.0
        %1143 = vmatpush2.msra.mxu0 0.0
        %1144 = vmatprep.subr.mxu0 0.0
        %1145 = vmatpush2.msra.mxu0 0.0
        %1146 = vmatprep.subr.mxu0 0.0
        %1147 = vmatpush2.msra.mxu0 0.0
        %1148 = vmatprep.subr.mxu0 0.0
        %1149 = vmatpush2.msra.mxu0 0.0
        %1150 = vmatprep.subr.mxu0 0.0
        %1151 = vmatpush2.msra.mxu0 0.0
        %1152 = vmatprep.subr.mxu0 0.0
        %1153 = vmatpush2.msra.mxu0 0.0
        %1154 = vmatprep.subr.mxu0 0.0
        %1155 = vmatpush2.msra.mxu0 0.0
        %1156 = vmatprep.subr.mxu0 0.0
        %1157 = vmatpush2.msra.mxu0 0.0
        %1158 = vmatprep.subr.mxu0 0.0
        %1159 = vmatpush2.msra.mxu0 0.0
        %1160 = vmatprep.subr.mxu0 0.0
        %1161 = vmatpush2.msra.mxu0 0.0
        %1162 = vmatprep.subr.mxu0 0.0
        %1163 = vmatpush2.msra.mxu0 0.0
        %1164 = vmatprep.mubr.f32.mxu0 0.0
        %1165 = vmatmul.mubr.f32.gmra.mxu0 %v1086
        %v1166 = vpop.f32.mrf.mxu0
        %v1167 = vadd.f32 %v1062, %v1166
        %v1168 = vpop.f32.mrf.mxu0
        %1169 = vmatprep.mubr.f32.mxu0 0.0
        %1170 = vmatmul.mubr.f32.gmra.mxu0 %v1089
        %v1171 = vpop.f32.mrf.mxu0
        %v1172 = vadd.f32 %v1067, %v1171
        %v1173 = vpop.f32.mrf.mxu0
        %1174 = vmatprep.mubr.f32.mxu0 0.0
        %1175 = vmatmul.mubr.f32.gmra.mxu0 %v1092
        %v1176 = vpop.f32.mrf.mxu0
        %v1177 = vadd.f32 %v1072, %v1176
        %v1178 = vpop.f32.mrf.mxu0
        %1179 = vmatprep.mubr.f32.mxu0 0.0
        %1180 = vmatmul.mubr.f32.gmra.mxu0 %v1095
        %v1181 = vpop.f32.mrf.mxu0
        %v1182 = vadd.f32 %v1077, %v1181
        %v1183 = vpop.f32.mrf.mxu0
        %1184 = vmatprep.mubr.f32.mxu0 0.0
        %1185 = vmatmul.mubr.f32.gmra.mxu0 %v1098
        %v1186 = vpop.f32.mrf.mxu0
        %v1187 = vadd.f32 %v1082, %v1186
        %v1188 = vpop.f32.mrf.mxu0
        %1189 = vdwg.mxu0
        %s1190 = scalar_lea.vmem %s3, 80
        %v1191 = vld [vmem:[%s1190] sm:$0xff]
        %v1192 = vld [vmem:[%s1190 + $0x8] sm:$0xff]
        %v1193 = vld [vmem:[%s1190 + $0x10] sm:$0xff]
        %v1194 = vld [vmem:[%s1190 + $0x18] sm:$0xff]
        %v1195 = vld [vmem:[%s1190 + $0x20] sm:$0x7f]
        %v1197 = vsel %vm749, %v1191, 0
        %v1200 = vsel %vm749, %v1192, 0
        %v1203 = vsel %vm749, %v1193, 0
        %v1206 = vsel %vm749, %v1194, 0
        %v1209 = vsel %vm749, %v1195, 0
        %1211 = vmatprep.subr.mxu0 0.0
        %1212 = vmatpush1.msra.mxu0 0.0
        %1213 = vmatprep.subr.mxu0 0.0
        %1214 = vmatpush1.msra.mxu0 0.0
        %1215 = vmatprep.subr.mxu0 0.0
        %1216 = vmatpush1.msra.mxu0 0.0
        %1217 = vmatprep.subr.mxu0 0.0
        %1218 = vmatpush1.msra.mxu0 0.0
        %1219 = vmatprep.subr.mxu0 0.0
        %1220 = vmatpush1.msra.mxu0 0.0
        %1221 = vmatprep.subr.mxu0 0.0
        %1222 = vmatpush1.msra.mxu0 0.0
        %1223 = vmatprep.subr.mxu0 0.0
        %1224 = vmatpush1.msra.mxu0 %v767
        %1225 = vmatprep.subr.mxu0 0.0
        %1226 = vmatpush1.msra.mxu0 %v742
        %1227 = vmatprep.subr.mxu0 0.0
        %1228 = vmatpush1.msra.mxu0 %v741
        %1229 = vmatprep.subr.mxu0 0.0
        %1230 = vmatpush1.msra.mxu0 %v740
        %1231 = vmatprep.subr.mxu0 0.0
        %1232 = vmatpush1.msra.mxu0 %v739
        %1233 = vmatprep.subr.mxu0 0.0
        %1234 = vmatpush1.msra.mxu0 %v738
        %1235 = vmatprep.subr.mxu0 0.0
        %1236 = vmatpush1.msra.mxu0 %v737
        %1237 = vmatprep.subr.mxu0 0.0
        %1238 = vmatpush1.msra.mxu0 %v736
        %1239 = vmatprep.subr.mxu0 0.0
        %1240 = vmatpush1.msra.mxu0 %v735
        %1241 = vmatprep.subr.mxu0 0.0
        %1242 = vmatpush1.msra.mxu0 %v734
        %1243 = vmatprep.subr.mxu0 0.0
        %1244 = vmatpush2.msra.mxu0 0.0
        %1245 = vmatprep.subr.mxu0 0.0
        %1246 = vmatpush2.msra.mxu0 0.0
        %1247 = vmatprep.subr.mxu0 0.0
        %1248 = vmatpush2.msra.mxu0 0.0
        %1249 = vmatprep.subr.mxu0 0.0
        %1250 = vmatpush2.msra.mxu0 0.0
        %1251 = vmatprep.subr.mxu0 0.0
        %1252 = vmatpush2.msra.mxu0 0.0
        %1253 = vmatprep.subr.mxu0 0.0
        %1254 = vmatpush2.msra.mxu0 0.0
        %1255 = vmatprep.subr.mxu0 0.0
        %1256 = vmatpush2.msra.mxu0 0.0
        %1257 = vmatprep.subr.mxu0 0.0
        %1258 = vmatpush2.msra.mxu0 0.0
        %1259 = vmatprep.subr.mxu0 0.0
        %1260 = vmatpush2.msra.mxu0 0.0
        %1261 = vmatprep.subr.mxu0 0.0
        %1262 = vmatpush2.msra.mxu0 0.0
        %1263 = vmatprep.subr.mxu0 0.0
        %1264 = vmatpush2.msra.mxu0 0.0
        %1265 = vmatprep.subr.mxu0 0.0
        %1266 = vmatpush2.msra.mxu0 0.0
        %1267 = vmatprep.subr.mxu0 0.0
        %1268 = vmatpush2.msra.mxu0 0.0
        %1269 = vmatprep.subr.mxu0 0.0
        %1270 = vmatpush2.msra.mxu0 0.0
        %1271 = vmatprep.subr.mxu0 0.0
        %1272 = vmatpush2.msra.mxu0 0.0
        %1273 = vmatprep.subr.mxu0 0.0
        %1274 = vmatpush2.msra.mxu0 0.0
        %1275 = vmatprep.mubr.f32.mxu0 0.0
        %1276 = vmatmul.mubr.f32.gmra.mxu0 %v1197
        %v1277 = vpop.f32.mrf.mxu0
        %v1278 = vadd.f32 0.0, %v1277
        %v1279 = vpop.f32.mrf.mxu0
        %1280 = vmatprep.mubr.f32.mxu0 0.0
        %1281 = vmatmul.mubr.f32.gmra.mxu0 %v1200
        %v1282 = vpop.f32.mrf.mxu0
        %v1283 = vadd.f32 0.0, %v1282
        %v1284 = vpop.f32.mrf.mxu0
        %1285 = vmatprep.mubr.f32.mxu0 0.0
        %1286 = vmatmul.mubr.f32.gmra.mxu0 %v1203
        %v1287 = vpop.f32.mrf.mxu0
        %v1288 = vadd.f32 0.0, %v1287
        %v1289 = vpop.f32.mrf.mxu0
        %1290 = vmatprep.mubr.f32.mxu0 0.0
        %1291 = vmatmul.mubr.f32.gmra.mxu0 %v1206
        %v1292 = vpop.f32.mrf.mxu0
        %v1293 = vadd.f32 0.0, %v1292
        %v1294 = vpop.f32.mrf.mxu0
        %1295 = vmatprep.mubr.f32.mxu0 0.0
        %1296 = vmatmul.mubr.f32.gmra.mxu0 %v1209
        %v1297 = vpop.f32.mrf.mxu0
        %v1298 = vadd.f32 0.0, %v1297
        %v1299 = vpop.f32.mrf.mxu0
        %1300 = vdwg.mxu0
        %s1301 = scalar_lea.vmem [#allocation2], 64
        %v1302 = vld [vmem:[%s1301] sm:$0xff]
        %v1303 = vld [vmem:[%s1301 + $0x8] sm:$0xff]
        %v1304 = vld [vmem:[%s1301 + $0x10] sm:$0xff]
        %v1305 = vld [vmem:[%s1301 + $0x18] sm:$0xff]
        %v1307 = vsel %vm979, %v1278, 0
        %v1310 = vsel %vm979, %v1283, 0
        %v1313 = vsel %vm979, %v1288, 0
        %v1316 = vsel %vm979, %v1293, 0
        %v1319 = vsel %vm979, %v1298, 0
        %1321 = vmatprep.subr.mxu0 0.0
        %1322 = vmatpush1.msra.mxu0 0.0
        %1323 = vmatprep.subr.mxu0 0.0
        %1324 = vmatpush1.msra.mxu0 0.0
        %1325 = vmatprep.subr.mxu0 0.0
        %1326 = vmatpush1.msra.mxu0 0.0
        %1327 = vmatprep.subr.mxu0 0.0
        %1328 = vmatpush1.msra.mxu0 0.0
        %1329 = vmatprep.subr.mxu0 0.0
        %1330 = vmatpush1.msra.mxu0 0.0
        %1331 = vmatprep.subr.mxu0 0.0
        %1332 = vmatpush1.msra.mxu0 0.0
        %1333 = vmatprep.subr.mxu0 0.0
        %1334 = vmatpush1.msra.mxu0 0.0
        %1335 = vmatprep.subr.mxu0 0.0
        %1336 = vmatpush1.msra.mxu0 0.0
        %1337 = vmatprep.subr.mxu0 0.0
        %1338 = vmatpush1.msra.mxu0 0.0
        %1339 = vmatprep.subr.mxu0 0.0
        %1340 = vmatpush1.msra.mxu0 0.0
        %1341 = vmatprep.subr.mxu0 0.0
        %1342 = vmatpush1.msra.mxu0 0.0
        %1343 = vmatprep.subr.mxu0 0.0
        %1344 = vmatpush1.msra.mxu0 0.0
        %1345 = vmatprep.subr.mxu0 0.0
        %1346 = vmatpush1.msra.mxu0 %v1305
        %1347 = vmatprep.subr.mxu0 0.0
        %1348 = vmatpush1.msra.mxu0 %v1304
        %1349 = vmatprep.subr.mxu0 0.0
        %1350 = vmatpush1.msra.mxu0 %v1303
        %1351 = vmatprep.subr.mxu0 0.0
        %1352 = vmatpush1.msra.mxu0 %v1302
        %1353 = vmatprep.subr.mxu0 0.0
        %1354 = vmatpush2.msra.mxu0 0.0
        %1355 = vmatprep.subr.mxu0 0.0
        %1356 = vmatpush2.msra.mxu0 0.0
        %1357 = vmatprep.subr.mxu0 0.0
        %1358 = vmatpush2.msra.mxu0 0.0
        %1359 = vmatprep.subr.mxu0 0.0
        %1360 = vmatpush2.msra.mxu0 0.0
        %1361 = vmatprep.subr.mxu0 0.0
        %1362 = vmatpush2.msra.mxu0 0.0
        %1363 = vmatprep.subr.mxu0 0.0
        %1364 = vmatpush2.msra.mxu0 0.0
        %1365 = vmatprep.subr.mxu0 0.0
        %1366 = vmatpush2.msra.mxu0 0.0
        %1367 = vmatprep.subr.mxu0 0.0
        %1368 = vmatpush2.msra.mxu0 0.0
        %1369 = vmatprep.subr.mxu0 0.0
        %1370 = vmatpush2.msra.mxu0 0.0
        %1371 = vmatprep.subr.mxu0 0.0
        %1372 = vmatpush2.msra.mxu0 0.0
        %1373 = vmatprep.subr.mxu0 0.0
        %1374 = vmatpush2.msra.mxu0 0.0
        %1375 = vmatprep.subr.mxu0 0.0
        %1376 = vmatpush2.msra.mxu0 0.0
        %1377 = vmatprep.subr.mxu0 0.0
        %1378 = vmatpush2.msra.mxu0 0.0
        %1379 = vmatprep.subr.mxu0 0.0
        %1380 = vmatpush2.msra.mxu0 0.0
        %1381 = vmatprep.subr.mxu0 0.0
        %1382 = vmatpush2.msra.mxu0 0.0
        %1383 = vmatprep.subr.mxu0 0.0
        %1384 = vmatpush2.msra.mxu0 0.0
        %1385 = vmatprep.mubr.f32.mxu0 0.0
        %1386 = vmatmul.mubr.f32.gmra.mxu0 %v1307
        %v1387 = vpop.f32.mrf.mxu0
        %v1388 = vadd.f32 0.0, %v1387
        %v1389 = vpop.f32.mrf.mxu0
        %1390 = vmatprep.mubr.f32.mxu0 0.0
        %1391 = vmatmul.mubr.f32.gmra.mxu0 %v1310
        %v1392 = vpop.f32.mrf.mxu0
        %v1393 = vadd.f32 0.0, %v1392
        %v1394 = vpop.f32.mrf.mxu0
        %1395 = vmatprep.mubr.f32.mxu0 0.0
        %1396 = vmatmul.mubr.f32.gmra.mxu0 %v1313
        %v1397 = vpop.f32.mrf.mxu0
        %v1398 = vadd.f32 0.0, %v1397
        %v1399 = vpop.f32.mrf.mxu0
        %1400 = vmatprep.mubr.f32.mxu0 0.0
        %1401 = vmatmul.mubr.f32.gmra.mxu0 %v1316
        %v1402 = vpop.f32.mrf.mxu0
        %v1403 = vadd.f32 0.0, %v1402
        %v1404 = vpop.f32.mrf.mxu0
        %1405 = vmatprep.mubr.f32.mxu0 0.0
        %1406 = vmatmul.mubr.f32.gmra.mxu0 %v1319
        %v1407 = vpop.f32.mrf.mxu0
        %v1408 = vadd.f32 0.0, %v1407
        %v1409 = vpop.f32.mrf.mxu0
        %1410 = vdwg.mxu0
        %v1411 = vadd.f32 %v1167, %v1388
        %v1412 = vadd.f32 %v1172, %v1393
        %v1413 = vadd.f32 %v1177, %v1398
        %v1414 = vadd.f32 %v1182, %v1403
        %v1415 = vadd.f32 %v1187, %v1408
        %v1416 = vld [vmem:[%s5] sm:$0x1]
        %v1418 = vlaneseq
        %v1419 = vshrl.u32 %v1418, 7
        %v1420 = vsub.s32 0, %v1419
        %v1421 = vrot.slane %v1416, %v1420
        %v1423 = vadd.f32 %v1411, %v1421
        %v1424 = vadd.f32 %v1412, %v1421
        %v1425 = vadd.f32 %v1413, %v1421
        %v1426 = vadd.f32 %v1414, %v1421
        %v1427 = vadd.f32 %v1415, %v1421
        %v1428 = vmul.f32 %v1423, %v1423
        %v1429 = vmul.f32 %v1424, %v1424
        %v1430 = vmul.f32 %v1425, %v1425
        %v1431 = vmul.f32 %v1426, %v1426
        %v1432 = vmul.f32 %v1427, %v1427
        %v1433 = vmul.f32 %v1423, %v1428
        %v1434 = vmul.f32 %v1424, %v1429
        %v1435 = vmul.f32 %v1425, %v1430
        %v1436 = vmul.f32 %v1426, %v1431
        %v1437 = vmul.f32 %v1427, %v1432
        %v1438 = vmul.f32 %v1433, 0.044715
        %v1439 = vmul.f32 %v1434, 0.044715
        %v1440 = vmul.f32 %v1435, 0.044715
        %v1441 = vmul.f32 %v1436, 0.044715
        %v1442 = vmul.f32 %v1437, 0.044715
        %v1443 = vadd.f32 %v1423, %v1438
        %v1444 = vadd.f32 %v1424, %v1439
        %v1445 = vadd.f32 %v1425, %v1440
        %v1446 = vadd.f32 %v1426, %v1441
        %v1447 = vadd.f32 %v1427, %v1442
        %v1448 = vmul.f32 %v1443, 0.7978846
        %v1449 = vmul.f32 %v1444, 0.7978846
        %v1450 = vmul.f32 %v1445, 0.7978846
        %v1451 = vmul.f32 %v1446, 0.7978846
        %v1452 = vmul.f32 %v1447, 0.7978846
        %v1453 = vtanh.pop %v1448
        %v1454 = vtanh.pop %v1449
        %v1455 = vtanh.pop %v1450
        %v1456 = vtanh.pop %v1451
        %v1457 = vtanh.pop %v1452
        %v1458 = vadd.f32 %v1453, 1.0
        %v1459 = vadd.f32 %v1454, 1.0
        %v1460 = vadd.f32 %v1455, 1.0
        %v1461 = vadd.f32 %v1456, 1.0
        %v1462 = vadd.f32 %v1457, 1.0
        %v1463 = vmul.f32 %v1458, 0.5
        %v1464 = vmul.f32 %v1459, 0.5
        %v1465 = vmul.f32 %v1460, 0.5
        %v1466 = vmul.f32 %v1461, 0.5
        %v1467 = vmul.f32 %v1462, 0.5
        %v1468 = vmul.f32 %v1423, %v1463
        %v1469 = vmul.f32 %v1424, %v1464
        %v1470 = vmul.f32 %v1425, %v1465
        %v1471 = vmul.f32 %v1426, %v1466
        %v1472 = vmul.f32 %v1427, %v1467
        %v1473 = vld [vmem:[#allocation4] sm:$0xff]
        %v1474 = vld [vmem:[#allocation4 + $0x8] sm:$0xff]
        %v1475 = vld [vmem:[#allocation4 + $0x10] sm:$0x7]
        %vm1476 = vcmask 318464
        %v1478 = vsel %vm1476, %v1473, 0
        %v1481 = vsel %vm1476, %v1474, 0
        %v1484 = vsel %vm1476, %v1475, 0
        %v1487 = vsel %vm765, %v1472, 0
        %1489 = vmatprep.subr.mxu0 0.0
        %1490 = vmatpush1.msra.mxu0 0.0
        %1491 = vmatprep.subr.mxu0 0.0
        %1492 = vmatpush1.msra.mxu0 0.0
        %1493 = vmatprep.subr.mxu0 0.0
        %1494 = vmatpush1.msra.mxu0 0.0
        %1495 = vmatprep.subr.mxu0 0.0
        %1496 = vmatpush1.msra.mxu0 0.0
        %1497 = vmatprep.subr.mxu0 0.0
        %1498 = vmatpush1.msra.mxu0 0.0
        %1499 = vmatprep.subr.mxu0 0.0
        %1500 = vmatpush1.msra.mxu0 0.0
        %1501 = vmatprep.subr.mxu0 0.0
        %1502 = vmatpush1.msra.mxu0 0.0
        %1503 = vmatprep.subr.mxu0 0.0
        %1504 = vmatpush1.msra.mxu0 0.0
        %1505 = vmatprep.subr.mxu0 0.0
        %1506 = vmatpush1.msra.mxu0 0.0
        %1507 = vmatprep.subr.mxu0 0.0
        %1508 = vmatpush1.msra.mxu0 0.0
        %1509 = vmatprep.subr.mxu0 0.0
        %1510 = vmatpush1.msra.mxu0 0.0
        %1511 = vmatprep.subr.mxu0 0.0
        %1512 = vmatpush1.msra.mxu0 %v1487
        %1513 = vmatprep.subr.mxu0 0.0
        %1514 = vmatpush1.msra.mxu0 %v1471
        %1515 = vmatprep.subr.mxu0 0.0
        %1516 = vmatpush1.msra.mxu0 %v1470
        %1517 = vmatprep.subr.mxu0 0.0
        %1518 = vmatpush1.msra.mxu0 %v1469
        %1519 = vmatprep.subr.mxu0 0.0
        %1520 = vmatpush1.msra.mxu0 %v1468
        %1521 = vmatprep.subr.mxu0 0.0
        %1522 = vmatpush2.msra.mxu0 0.0
        %1523 = vmatprep.subr.mxu0 0.0
        %1524 = vmatpush2.msra.mxu0 0.0
        %1525 = vmatprep.subr.mxu0 0.0
        %1526 = vmatpush2.msra.mxu0 0.0
        %1527 = vmatprep.subr.mxu0 0.0
        %1528 = vmatpush2.msra.mxu0 0.0
        %1529 = vmatprep.subr.mxu0 0.0
        %1530 = vmatpush2.msra.mxu0 0.0
        %1531 = vmatprep.subr.mxu0 0.0
        %1532 = vmatpush2.msra.mxu0 0.0
        %1533 = vmatprep.subr.mxu0 0.0
        %1534 = vmatpush2.msra.mxu0 0.0
        %1535 = vmatprep.subr.mxu0 0.0
        %1536 = vmatpush2.msra.mxu0 0.0
        %1537 = vmatprep.subr.mxu0 0.0
        %1538 = vmatpush2.msra.mxu0 0.0
        %1539 = vmatprep.subr.mxu0 0.0
        %1540 = vmatpush2.msra.mxu0 0.0
        %1541 = vmatprep.subr.mxu0 0.0
        %1542 = vmatpush2.msra.mxu0 0.0
        %1543 = vmatprep.subr.mxu0 0.0
        %1544 = vmatpush2.msra.mxu0 0.0
        %1545 = vmatprep.subr.mxu0 0.0
        %1546 = vmatpush2.msra.mxu0 0.0
        %1547 = vmatprep.subr.mxu0 0.0
        %1548 = vmatpush2.msra.mxu0 0.0
        %1549 = vmatprep.subr.mxu0 0.0
        %1550 = vmatpush2.msra.mxu0 0.0
        %1551 = vmatprep.subr.mxu0 0.0
        %1552 = vmatpush2.msra.mxu0 0.0
        %1553 = vmatprep.mubr.f32.mxu0 0.0
        %1554 = vmatmul.mubr.f32.gmra.mxu0 %v1478
        %v1555 = vpop.f32.mrf.mxu0
        %v1556 = vadd.f32 0.0, %v1555
        %v1557 = vpop.f32.mrf.mxu0
        %1558 = vmatprep.mubr.f32.mxu0 0.0
        %1559 = vmatmul.mubr.f32.gmra.mxu0 %v1481
        %v1560 = vpop.f32.mrf.mxu0
        %v1561 = vadd.f32 0.0, %v1560
        %v1562 = vpop.f32.mrf.mxu0
        %1563 = vmatprep.mubr.f32.mxu0 0.0
        %1564 = vmatmul.mubr.f32.gmra.mxu0 %v1484
        %v1565 = vpop.f32.mrf.mxu0
        %v1566 = vadd.f32 0.0, %v1565
        %v1567 = vpop.f32.mrf.mxu0
        %1568 = vdwg.mxu0
        %v1569 = vld [vmem:[#allocation6] sm:$0xff]
        %v1570 = vld [vmem:[#allocation6 + $0x8] sm:$0xff]
        %v1571 = vld [vmem:[#allocation6 + $0x10] sm:$0xff]
        %v1572 = vld [vmem:[#allocation6 + $0x18] sm:$0xff]
        %s1573 = scalar_lea.vmem [#allocation4], 24
        %v1574 = vld [vmem:[%s1573] sm:$0xff]
        %v1575 = vld [vmem:[%s1573 + $0x8] sm:$0xff]
        %v1576 = vld [vmem:[%s1573 + $0x10] sm:$0x7]
        %v1578 = vsel %vm1476, %v1574, 0
        %v1581 = vsel %vm1476, %v1575, 0
        %v1584 = vsel %vm1476, %v1576, 0
        %1586 = vmatprep.subr.mxu0 0.0
        %1587 = vmatpush1.msra.mxu0 0.0
        %1588 = vmatprep.subr.mxu0 0.0
        %1589 = vmatpush1.msra.mxu0 0.0
        %1590 = vmatprep.subr.mxu0 0.0
        %1591 = vmatpush1.msra.mxu0 0.0
        %1592 = vmatprep.subr.mxu0 0.0
        %1593 = vmatpush1.msra.mxu0 0.0
        %1594 = vmatprep.subr.mxu0 0.0
        %1595 = vmatpush1.msra.mxu0 0.0
        %1596 = vmatprep.subr.mxu0 0.0
        %1597 = vmatpush1.msra.mxu0 0.0
        %1598 = vmatprep.subr.mxu0 0.0
        %1599 = vmatpush1.msra.mxu0 0.0
        %1600 = vmatprep.subr.mxu0 0.0
        %1601 = vmatpush1.msra.mxu0 0.0
        %1602 = vmatprep.subr.mxu0 0.0
        %1603 = vmatpush1.msra.mxu0 0.0
        %1604 = vmatprep.subr.mxu0 0.0
        %1605 = vmatpush1.msra.mxu0 0.0
        %1606 = vmatprep.subr.mxu0 0.0
        %1607 = vmatpush1.msra.mxu0 0.0
        %1608 = vmatprep.subr.mxu0 0.0
        %1609 = vmatpush1.msra.mxu0 %v1487
        %1610 = vmatprep.subr.mxu0 0.0
        %1611 = vmatpush1.msra.mxu0 %v1471
        %1612 = vmatprep.subr.mxu0 0.0
        %1613 = vmatpush1.msra.mxu0 %v1470
        %1614 = vmatprep.subr.mxu0 0.0
        %1615 = vmatpush1.msra.mxu0 %v1469
        %1616 = vmatprep.subr.mxu0 0.0
        %1617 = vmatpush1.msra.mxu0 %v1468
        %1618 = vmatprep.subr.mxu0 0.0
        %1619 = vmatpush2.msra.mxu0 0.0
        %1620 = vmatprep.subr.mxu0 0.0
        %1621 = vmatpush2.msra.mxu0 0.0
        %1622 = vmatprep.subr.mxu0 0.0
        %1623 = vmatpush2.msra.mxu0 0.0
        %1624 = vmatprep.subr.mxu0 0.0
        %1625 = vmatpush2.msra.mxu0 0.0
        %1626 = vmatprep.subr.mxu0 0.0
        %1627 = vmatpush2.msra.mxu0 0.0
        %1628 = vmatprep.subr.mxu0 0.0
        %1629 = vmatpush2.msra.mxu0 0.0
        %1630 = vmatprep.subr.mxu0 0.0
        %1631 = vmatpush2.msra.mxu0 0.0
        %1632 = vmatprep.subr.mxu0 0.0
        %1633 = vmatpush2.msra.mxu0 0.0
        %1634 = vmatprep.subr.mxu0 0.0
        %1635 = vmatpush2.msra.mxu0 0.0
        %1636 = vmatprep.subr.mxu0 0.0
        %1637 = vmatpush2.msra.mxu0 0.0
        %1638 = vmatprep.subr.mxu0 0.0
        %1639 = vmatpush2.msra.mxu0 0.0
        %1640 = vmatprep.subr.mxu0 0.0
        %1641 = vmatpush2.msra.mxu0 0.0
        %1642 = vmatprep.subr.mxu0 0.0
        %1643 = vmatpush2.msra.mxu0 0.0
        %1644 = vmatprep.subr.mxu0 0.0
        %1645 = vmatpush2.msra.mxu0 0.0
        %1646 = vmatprep.subr.mxu0 0.0
        %1647 = vmatpush2.msra.mxu0 0.0
        %1648 = vmatprep.subr.mxu0 0.0
        %1649 = vmatpush2.msra.mxu0 0.0
        %1650 = vmatprep.mubr.f32.mxu0 0.0
        %1651 = vmatmul.mubr.f32.gmra.mxu0 %v1578
        %v1652 = vpop.f32.mrf.mxu0
        %v1653 = vadd.f32 0.0, %v1652
        %v1654 = vpop.f32.mrf.mxu0
        %1655 = vmatprep.mubr.f32.mxu0 0.0
        %1656 = vmatmul.mubr.f32.gmra.mxu0 %v1581
        %v1657 = vpop.f32.mrf.mxu0
        %v1658 = vadd.f32 0.0, %v1657
        %v1659 = vpop.f32.mrf.mxu0
        %1660 = vmatprep.mubr.f32.mxu0 0.0
        %1661 = vmatmul.mubr.f32.gmra.mxu0 %v1584
        %v1662 = vpop.f32.mrf.mxu0
        %v1663 = vadd.f32 0.0, %v1662
        %v1664 = vpop.f32.mrf.mxu0
        %1665 = vdwg.mxu0
        %s1666 = scalar_lea.vmem [#allocation6], 32
        %v1667 = vld [vmem:[%s1666] sm:$0xff]
        %v1668 = vld [vmem:[%s1666 + $0x8] sm:$0xff]
        %v1669 = vld [vmem:[%s1666 + $0x10] sm:$0xff]
        %v1670 = vld [vmem:[%s1666 + $0x18] sm:$0xff]
        %v1672 = vsel %vm979, %v1653, 0
        %v1675 = vsel %vm979, %v1658, 0
        %v1678 = vsel %vm979, %v1663, 0
        %1680 = vmatprep.subr.mxu0 0.0
        %1681 = vmatpush1.msra.mxu0 0.0
        %1682 = vmatprep.subr.mxu0 0.0
        %1683 = vmatpush1.msra.mxu0 0.0
        %1684 = vmatprep.subr.mxu0 0.0
        %1685 = vmatpush1.msra.mxu0 0.0
        %1686 = vmatprep.subr.mxu0 0.0
        %1687 = vmatpush1.msra.mxu0 0.0
        %1688 = vmatprep.subr.mxu0 0.0
        %1689 = vmatpush1.msra.mxu0 0.0
        %1690 = vmatprep.subr.mxu0 0.0
        %1691 = vmatpush1.msra.mxu0 0.0
        %1692 = vmatprep.subr.mxu0 0.0
        %1693 = vmatpush1.msra.mxu0 0.0
        %1694 = vmatprep.subr.mxu0 0.0
        %1695 = vmatpush1.msra.mxu0 0.0
        %1696 = vmatprep.subr.mxu0 0.0
        %1697 = vmatpush1.msra.mxu0 0.0
        %1698 = vmatprep.subr.mxu0 0.0
        %1699 = vmatpush1.msra.mxu0 0.0
        %1700 = vmatprep.subr.mxu0 0.0
        %1701 = vmatpush1.msra.mxu0 0.0
        %1702 = vmatprep.subr.mxu0 0.0
        %1703 = vmatpush1.msra.mxu0 0.0
        %1704 = vmatprep.subr.mxu0 0.0
        %1705 = vmatpush1.msra.mxu0 %v1670
        %1706 = vmatprep.subr.mxu0 0.0
        %1707 = vmatpush1.msra.mxu0 %v1669
        %1708 = vmatprep.subr.mxu0 0.0
        %1709 = vmatpush1.msra.mxu0 %v1668
        %1710 = vmatprep.subr.mxu0 0.0
        %1711 = vmatpush1.msra.mxu0 %v1667
        %1712 = vmatprep.subr.mxu0 0.0
        %1713 = vmatpush2.msra.mxu0 0.0
        %1714 = vmatprep.subr.mxu0 0.0
        %1715 = vmatpush2.msra.mxu0 0.0
        %1716 = vmatprep.subr.mxu0 0.0
        %1717 = vmatpush2.msra.mxu0 0.0
        %1718 = vmatprep.subr.mxu0 0.0
        %1719 = vmatpush2.msra.mxu0 0.0
        %1720 = vmatprep.subr.mxu0 0.0
        %1721 = vmatpush2.msra.mxu0 0.0
        %1722 = vmatprep.subr.mxu0 0.0
        %1723 = vmatpush2.msra.mxu0 0.0
        %1724 = vmatprep.subr.mxu0 0.0
        %1725 = vmatpush2.msra.mxu0 0.0
        %1726 = vmatprep.subr.mxu0 0.0
        %1727 = vmatpush2.msra.mxu0 0.0
        %1728 = vmatprep.subr.mxu0 0.0
        %1729 = vmatpush2.msra.mxu0 0.0
        %1730 = vmatprep.subr.mxu0 0.0
        %1731 = vmatpush2.msra.mxu0 0.0
        %1732 = vmatprep.subr.mxu0 0.0
        %1733 = vmatpush2.msra.mxu0 0.0
        %1734 = vmatprep.subr.mxu0 0.0
        %1735 = vmatpush2.msra.mxu0 0.0
        %1736 = vmatprep.subr.mxu0 0.0
        %1737 = vmatpush2.msra.mxu0 0.0
        %1738 = vmatprep.subr.mxu0 0.0
        %1739 = vmatpush2.msra.mxu0 0.0
        %1740 = vmatprep.subr.mxu0 0.0
        %1741 = vmatpush2.msra.mxu0 0.0
        %1742 = vmatprep.subr.mxu0 0.0
        %1743 = vmatpush2.msra.mxu0 0.0
        %1744 = vmatprep.mubr.f32.mxu0 0.0
        %1745 = vmatmul.mubr.f32.gmra.mxu0 %v1672
        %v1746 = vpop.f32.mrf.mxu0
        %v1747 = vadd.f32 0.0, %v1746
        %v1748 = vpop.f32.mrf.mxu0
        %1749 = vmatprep.mubr.f32.mxu0 0.0
        %1750 = vmatmul.mubr.f32.gmra.mxu0 %v1675
        %v1751 = vpop.f32.mrf.mxu0
        %v1752 = vadd.f32 0.0, %v1751
        %v1753 = vpop.f32.mrf.mxu0
        %1754 = vmatprep.mubr.f32.mxu0 0.0
        %1755 = vmatmul.mubr.f32.gmra.mxu0 %v1678
        %v1756 = vpop.f32.mrf.mxu0
        %v1757 = vadd.f32 0.0, %v1756
        %v1758 = vpop.f32.mrf.mxu0
        %1759 = vdwg.mxu0
        %v1761 = vsel %vm979, %v1556, 0
        %v1764 = vsel %vm979, %v1561, 0
        %v1767 = vsel %vm979, %v1566, 0
        %1769 = vmatprep.subr.mxu0 0.0
        %1770 = vmatpush1.msra.mxu0 0.0
        %1771 = vmatprep.subr.mxu0 0.0
        %1772 = vmatpush1.msra.mxu0 0.0
        %1773 = vmatprep.subr.mxu0 0.0
        %1774 = vmatpush1.msra.mxu0 0.0
        %1775 = vmatprep.subr.mxu0 0.0
        %1776 = vmatpush1.msra.mxu0 0.0
        %1777 = vmatprep.subr.mxu0 0.0
        %1778 = vmatpush1.msra.mxu0 0.0
        %1779 = vmatprep.subr.mxu0 0.0
        %1780 = vmatpush1.msra.mxu0 0.0
        %1781 = vmatprep.subr.mxu0 0.0
        %1782 = vmatpush1.msra.mxu0 0.0
        %1783 = vmatprep.subr.mxu0 0.0
        %1784 = vmatpush1.msra.mxu0 0.0
        %1785 = vmatprep.subr.mxu0 0.0
        %1786 = vmatpush1.msra.mxu0 0.0
        %1787 = vmatprep.subr.mxu0 0.0
        %1788 = vmatpush1.msra.mxu0 0.0
        %1789 = vmatprep.subr.mxu0 0.0
        %1790 = vmatpush1.msra.mxu0 0.0
        %1791 = vmatprep.subr.mxu0 0.0
        %1792 = vmatpush1.msra.mxu0 0.0
        %1793 = vmatprep.subr.mxu0 0.0
        %1794 = vmatpush1.msra.mxu0 %v1572
        %1795 = vmatprep.subr.mxu0 0.0
        %1796 = vmatpush1.msra.mxu0 %v1571
        %1797 = vmatprep.subr.mxu0 0.0
        %1798 = vmatpush1.msra.mxu0 %v1570
        %1799 = vmatprep.subr.mxu0 0.0
        %1800 = vmatpush1.msra.mxu0 %v1569
        %1801 = vmatprep.subr.mxu0 0.0
        %1802 = vmatpush2.msra.mxu0 0.0
        %1803 = vmatprep.subr.mxu0 0.0
        %1804 = vmatpush2.msra.mxu0 0.0
        %1805 = vmatprep.subr.mxu0 0.0
        %1806 = vmatpush2.msra.mxu0 0.0
        %1807 = vmatprep.subr.mxu0 0.0
        %1808 = vmatpush2.msra.mxu0 0.0
        %1809 = vmatprep.subr.mxu0 0.0
        %1810 = vmatpush2.msra.mxu0 0.0
        %1811 = vmatprep.subr.mxu0 0.0
        %1812 = vmatpush2.msra.mxu0 0.0
        %1813 = vmatprep.subr.mxu0 0.0
        %1814 = vmatpush2.msra.mxu0 0.0
        %1815 = vmatprep.subr.mxu0 0.0
        %1816 = vmatpush2.msra.mxu0 0.0
        %1817 = vmatprep.subr.mxu0 0.0
        %1818 = vmatpush2.msra.mxu0 0.0
        %1819 = vmatprep.subr.mxu0 0.0
        %1820 = vmatpush2.msra.mxu0 0.0
        %1821 = vmatprep.subr.mxu0 0.0
        %1822 = vmatpush2.msra.mxu0 0.0
        %1823 = vmatprep.subr.mxu0 0.0
        %1824 = vmatpush2.msra.mxu0 0.0
        %1825 = vmatprep.subr.mxu0 0.0
        %1826 = vmatpush2.msra.mxu0 0.0
        %1827 = vmatprep.subr.mxu0 0.0
        %1828 = vmatpush2.msra.mxu0 0.0
        %1829 = vmatprep.subr.mxu0 0.0
        %1830 = vmatpush2.msra.mxu0 0.0
        %1831 = vmatprep.subr.mxu0 0.0
        %1832 = vmatpush2.msra.mxu0 0.0
        %1833 = vmatprep.mubr.f32.mxu0 0.0
        %1834 = vmatmul.mubr.f32.gmra.mxu0 %v1761
        %v1835 = vpop.f32.mrf.mxu0
        %v1836 = vadd.f32 %v1747, %v1835
        %v1837 = vpop.f32.mrf.mxu0
        %1838 = vmatprep.mubr.f32.mxu0 0.0
        %1839 = vmatmul.mubr.f32.gmra.mxu0 %v1764
        %v1840 = vpop.f32.mrf.mxu0
        %v1841 = vadd.f32 %v1752, %v1840
        %v1842 = vpop.f32.mrf.mxu0
        %1843 = vmatprep.mubr.f32.mxu0 0.0
        %1844 = vmatmul.mubr.f32.gmra.mxu0 %v1767
        %v1845 = vpop.f32.mrf.mxu0
        %v1846 = vadd.f32 %v1757, %v1845
        %v1847 = vpop.f32.mrf.mxu0
        %1848 = vdwg.mxu0
        %s1849 = scalar_lea.vmem [#allocation4], 48
        %v1850 = vld [vmem:[%s1849] sm:$0xff]
        %v1851 = vld [vmem:[%s1849 + $0x8] sm:$0xff]
        %v1852 = vld [vmem:[%s1849 + $0x10] sm:$0x7]
        %v1854 = vsel %vm1476, %v1850, 0
        %v1857 = vsel %vm1476, %v1851, 0
        %v1860 = vsel %vm1476, %v1852, 0
        %1862 = vmatprep.subr.mxu0 0.0
        %1863 = vmatpush1.msra.mxu0 0.0
        %1864 = vmatprep.subr.mxu0 0.0
        %1865 = vmatpush1.msra.mxu0 0.0
        %1866 = vmatprep.subr.mxu0 0.0
        %1867 = vmatpush1.msra.mxu0 0.0
        %1868 = vmatprep.subr.mxu0 0.0
        %1869 = vmatpush1.msra.mxu0 0.0
        %1870 = vmatprep.subr.mxu0 0.0
        %1871 = vmatpush1.msra.mxu0 0.0
        %1872 = vmatprep.subr.mxu0 0.0
        %1873 = vmatpush1.msra.mxu0 0.0
        %1874 = vmatprep.subr.mxu0 0.0
        %1875 = vmatpush1.msra.mxu0 0.0
        %1876 = vmatprep.subr.mxu0 0.0
        %1877 = vmatpush1.msra.mxu0 0.0
        %1878 = vmatprep.subr.mxu0 0.0
        %1879 = vmatpush1.msra.mxu0 0.0
        %1880 = vmatprep.subr.mxu0 0.0
        %1881 = vmatpush1.msra.mxu0 0.0
        %1882 = vmatprep.subr.mxu0 0.0
        %1883 = vmatpush1.msra.mxu0 0.0
        %1884 = vmatprep.subr.mxu0 0.0
        %1885 = vmatpush1.msra.mxu0 %v1487
        %1886 = vmatprep.subr.mxu0 0.0
        %1887 = vmatpush1.msra.mxu0 %v1471
        %1888 = vmatprep.subr.mxu0 0.0
        %1889 = vmatpush1.msra.mxu0 %v1470
        %1890 = vmatprep.subr.mxu0 0.0
        %1891 = vmatpush1.msra.mxu0 %v1469
        %1892 = vmatprep.subr.mxu0 0.0
        %1893 = vmatpush1.msra.mxu0 %v1468
        %1894 = vmatprep.subr.mxu0 0.0
        %1895 = vmatpush2.msra.mxu0 0.0
        %1896 = vmatprep.subr.mxu0 0.0
        %1897 = vmatpush2.msra.mxu0 0.0
        %1898 = vmatprep.subr.mxu0 0.0
        %1899 = vmatpush2.msra.mxu0 0.0
        %1900 = vmatprep.subr.mxu0 0.0
        %1901 = vmatpush2.msra.mxu0 0.0
        %1902 = vmatprep.subr.mxu0 0.0
        %1903 = vmatpush2.msra.mxu0 0.0
        %1904 = vmatprep.subr.mxu0 0.0
        %1905 = vmatpush2.msra.mxu0 0.0
        %1906 = vmatprep.subr.mxu0 0.0
        %1907 = vmatpush2.msra.mxu0 0.0
        %1908 = vmatprep.subr.mxu0 0.0
        %1909 = vmatpush2.msra.mxu0 0.0
        %1910 = vmatprep.subr.mxu0 0.0
        %1911 = vmatpush2.msra.mxu0 0.0
        %1912 = vmatprep.subr.mxu0 0.0
        %1913 = vmatpush2.msra.mxu0 0.0
        %1914 = vmatprep.subr.mxu0 0.0
        %1915 = vmatpush2.msra.mxu0 0.0
        %1916 = vmatprep.subr.mxu0 0.0
        %1917 = vmatpush2.msra.mxu0 0.0
        %1918 = vmatprep.subr.mxu0 0.0
        %1919 = vmatpush2.msra.mxu0 0.0
        %1920 = vmatprep.subr.mxu0 0.0
        %1921 = vmatpush2.msra.mxu0 0.0
        %1922 = vmatprep.subr.mxu0 0.0
        %1923 = vmatpush2.msra.mxu0 0.0
        %1924 = vmatprep.subr.mxu0 0.0
        %1925 = vmatpush2.msra.mxu0 0.0
        %1926 = vmatprep.mubr.f32.mxu0 0.0
        %1927 = vmatmul.mubr.f32.gmra.mxu0 %v1854
        %v1928 = vpop.f32.mrf.mxu0
        %v1929 = vadd.f32 0.0, %v1928
        %v1930 = vpop.f32.mrf.mxu0
        %1931 = vmatprep.mubr.f32.mxu0 0.0
        %1932 = vmatmul.mubr.f32.gmra.mxu0 %v1857
        %v1933 = vpop.f32.mrf.mxu0
        %v1934 = vadd.f32 0.0, %v1933
        %v1935 = vpop.f32.mrf.mxu0
        %1936 = vmatprep.mubr.f32.mxu0 0.0
        %1937 = vmatmul.mubr.f32.gmra.mxu0 %v1860
        %v1938 = vpop.f32.mrf.mxu0
        %v1939 = vadd.f32 0.0, %v1938
        %v1940 = vpop.f32.mrf.mxu0
        %1941 = vdwg.mxu0
        %s1942 = scalar_lea.vmem [#allocation6], 64
        %v1943 = vld [vmem:[%s1942] sm:$0xff]
        %v1944 = vld [vmem:[%s1942 + $0x8] sm:$0xff]
        %v1945 = vld [vmem:[%s1942 + $0x10] sm:$0xff]
        %v1946 = vld [vmem:[%s1942 + $0x18] sm:$0xff]
        %v1948 = vsel %vm979, %v1929, 0
        %v1951 = vsel %vm979, %v1934, 0
        %v1954 = vsel %vm979, %v1939, 0
        %1956 = vmatprep.subr.mxu0 0.0
        %1957 = vmatpush1.msra.mxu0 0.0
        %1958 = vmatprep.subr.mxu0 0.0
        %1959 = vmatpush1.msra.mxu0 0.0
        %1960 = vmatprep.subr.mxu0 0.0
        %1961 = vmatpush1.msra.mxu0 0.0
        %1962 = vmatprep.subr.mxu0 0.0
        %1963 = vmatpush1.msra.mxu0 0.0
        %1964 = vmatprep.subr.mxu0 0.0
        %1965 = vmatpush1.msra.mxu0 0.0
        %1966 = vmatprep.subr.mxu0 0.0
        %1967 = vmatpush1.msra.mxu0 0.0
        %1968 = vmatprep.subr.mxu0 0.0
        %1969 = vmatpush1.msra.mxu0 0.0
        %1970 = vmatprep.subr.mxu0 0.0
        %1971 = vmatpush1.msra.mxu0 0.0
        %1972 = vmatprep.subr.mxu0 0.0
        %1973 = vmatpush1.msra.mxu0 0.0
        %1974 = vmatprep.subr.mxu0 0.0
        %1975 = vmatpush1.msra.mxu0 0.0
        %1976 = vmatprep.subr.mxu0 0.0
        %1977 = vmatpush1.msra.mxu0 0.0
        %1978 = vmatprep.subr.mxu0 0.0
        %1979 = vmatpush1.msra.mxu0 0.0
        %1980 = vmatprep.subr.mxu0 0.0
        %1981 = vmatpush1.msra.mxu0 %v1946
        %1982 = vmatprep.subr.mxu0 0.0
        %1983 = vmatpush1.msra.mxu0 %v1945
        %1984 = vmatprep.subr.mxu0 0.0
        %1985 = vmatpush1.msra.mxu0 %v1944
        %1986 = vmatprep.subr.mxu0 0.0
        %1987 = vmatpush1.msra.mxu0 %v1943
        %1988 = vmatprep.subr.mxu0 0.0
        %1989 = vmatpush2.msra.mxu0 0.0
        %1990 = vmatprep.subr.mxu0 0.0
        %1991 = vmatpush2.msra.mxu0 0.0
        %1992 = vmatprep.subr.mxu0 0.0
        %1993 = vmatpush2.msra.mxu0 0.0
        %1994 = vmatprep.subr.mxu0 0.0
        %1995 = vmatpush2.msra.mxu0 0.0
        %1996 = vmatprep.subr.mxu0 0.0
        %1997 = vmatpush2.msra.mxu0 0.0
        %1998 = vmatprep.subr.mxu0 0.0
        %1999 = vmatpush2.msra.mxu0 0.0
        %2000 = vmatprep.subr.mxu0 0.0
        %2001 = vmatpush2.msra.mxu0 0.0
        %2002 = vmatprep.subr.mxu0 0.0
        %2003 = vmatpush2.msra.mxu0 0.0
        %2004 = vmatprep.subr.mxu0 0.0
        %2005 = vmatpush2.msra.mxu0 0.0
        %2006 = vmatprep.subr.mxu0 0.0
        %2007 = vmatpush2.msra.mxu0 0.0
        %2008 = vmatprep.subr.mxu0 0.0
        %2009 = vmatpush2.msra.mxu0 0.0
        %2010 = vmatprep.subr.mxu0 0.0
        %2011 = vmatpush2.msra.mxu0 0.0
        %2012 = vmatprep.subr.mxu0 0.0
        %2013 = vmatpush2.msra.mxu0 0.0
        %2014 = vmatprep.subr.mxu0 0.0
        %2015 = vmatpush2.msra.mxu0 0.0
        %2016 = vmatprep.subr.mxu0 0.0
        %2017 = vmatpush2.msra.mxu0 0.0
        %2018 = vmatprep.subr.mxu0 0.0
        %2019 = vmatpush2.msra.mxu0 0.0
        %2020 = vmatprep.mubr.f32.mxu0 0.0
        %2021 = vmatmul.mubr.f32.gmra.mxu0 %v1948
        %v2022 = vpop.f32.mrf.mxu0
        %v2023 = vadd.f32 0.0, %v2022
        %v2024 = vpop.f32.mrf.mxu0
        %2025 = vmatprep.mubr.f32.mxu0 0.0
        %2026 = vmatmul.mubr.f32.gmra.mxu0 %v1951
        %v2027 = vpop.f32.mrf.mxu0
        %v2028 = vadd.f32 0.0, %v2027
        %v2029 = vpop.f32.mrf.mxu0
        %2030 = vmatprep.mubr.f32.mxu0 0.0
        %2031 = vmatmul.mubr.f32.gmra.mxu0 %v1954
        %v2032 = vpop.f32.mrf.mxu0
        %v2033 = vadd.f32 0.0, %v2032
        %v2034 = vpop.f32.mrf.mxu0
        %2035 = vdwg.mxu0
        %v2036 = vadd.f32 %v1836, %v2023
        %v2037 = vadd.f32 %v1841, %v2028
        %v2038 = vadd.f32 %v1846, %v2033
        %v2039 = vld [vmem:[%s8] sm:$0x1]
        %v2041 = vlaneseq
        %v2042 = vshrl.u32 %v2041, 7
        %v2043 = vsub.s32 0, %v2042
        %v2044 = vrot.slane %v2039, %v2043
        %v2046 = vadd.f32 %v2036, %v2044
        %v2047 = vadd.f32 %v2037, %v2044
        %v2048 = vadd.f32 %v2038, %v2044
        %v2049 = vmul.f32 %v2046, %v2046
        %v2050 = vmul.f32 %v2047, %v2047
        %v2051 = vmul.f32 %v2048, %v2048
        %v2052 = vmul.f32 %v2046, %v2049
        %v2053 = vmul.f32 %v2047, %v2050
        %v2054 = vmul.f32 %v2048, %v2051
        %v2055 = vmul.f32 %v2052, 0.044715
        %v2056 = vmul.f32 %v2053, 0.044715
        %v2057 = vmul.f32 %v2054, 0.044715
        %v2058 = vadd.f32 %v2046, %v2055
        %v2059 = vadd.f32 %v2047, %v2056
        %v2060 = vadd.f32 %v2048, %v2057
        %v2061 = vmul.f32 %v2058, 0.7978846
        %v2062 = vmul.f32 %v2059, 0.7978846
        %v2063 = vmul.f32 %v2060, 0.7978846
        %v2064 = vtanh.pop %v2061
        %v2065 = vtanh.pop %v2062
        %v2066 = vtanh.pop %v2063
        %v2067 = vadd.f32 %v2064, 1.0
        %v2068 = vadd.f32 %v2065, 1.0
        %v2069 = vadd.f32 %v2066, 1.0
        %v2070 = vmul.f32 %v2067, 0.5
        %v2071 = vmul.f32 %v2068, 0.5
        %v2072 = vmul.f32 %v2069, 0.5
        %v2073 = vmul.f32 %v2046, %v2070
        %v2074 = vmul.f32 %v2047, %v2071
        %v2075 = vmul.f32 %v2048, %v2072
        %v2076 = vld [vmem:[%s9] sm:$0x1]
        %v2077 = vld [vmem:[%s10] sm:$0x1]
        %v2078 = vsel %vm979, %v2073, 0.0
        %2079 = vadd.xlane.f32.xlu0 %v2078
        %v2080 = vpop.xlane.xlu0 %2079
        %v2081 = vsel %vm979, %v2074, 0.0
        %2082 = vadd.xlane.f32.xlu0 %v2081
        %v2083 = vpop.xlane.xlu0 %2082
        %vm2084 = vcmask 256000
        %v2085 = vsel %vm2084, %v2075, 0.0
        %2086 = vadd.xlane.f32.xlu0 %v2085
        %v2087 = vpop.xlane.xlu0 %2086
        %v2088 = vrcp.pop 32.0
        %v2089 = vmul.f32 %v2080, %v2088
        %v2090 = vmul.f32 %v2083, %v2088
        %v2091 = vmul.f32 %v2087, %v2088
        %v2092 = vsub.f32 %v2073, %v2089
        %v2093 = vsub.f32 %v2074, %v2090
        %v2094 = vsub.f32 %v2075, %v2091
        %v2095 = vmul.f32 %v2092, %v2092
        %v2096 = vmul.f32 %v2093, %v2093
        %v2097 = vmul.f32 %v2094, %v2094
        %v2098 = vsel %vm979, %v2095, 0.0
        %2099 = vadd.xlane.f32.xlu0 %v2098
        %v2100 = vpop.xlane.xlu0 %2099
        %v2101 = vsel %vm979, %v2096, 0.0
        %2102 = vadd.xlane.f32.xlu0 %v2101
        %v2103 = vpop.xlane.xlu0 %2102
        %v2104 = vsel %vm2084, %v2097, 0.0
        %2105 = vadd.xlane.f32.xlu0 %v2104
        %v2106 = vpop.xlane.xlu0 %2105
        %v2107 = vmul.f32 %v2100, %v2088
        %v2108 = vmul.f32 %v2103, %v2088
        %v2109 = vmul.f32 %v2106, %v2088
        %v2110 = vadd.f32 %v2107, 1e-05
        %v2111 = vadd.f32 %v2108, 1e-05
        %v2112 = vadd.f32 %v2109, 1e-05
        %v2113 = vrsqrt.pop %v2110
        %v2114 = vrsqrt.pop %v2111
        %v2115 = vrsqrt.pop %v2112
        %v2116 = vmul.f32 %v2092, %v2113
        %v2117 = vmul.f32 %v2093, %v2114
        %v2118 = vmul.f32 %v2094, %v2115
        %v2120 = vlaneseq
        %v2121 = vshrl.u32 %v2120, 7
        %v2122 = vsub.s32 0, %v2121
        %v2123 = vrot.slane %v2076, %v2122
        %v2125 = vmul.f32 %v2116, %v2123
        %v2126 = vmul.f32 %v2117, %v2123
        %v2127 = vmul.f32 %v2118, %v2123
        %v2129 = vlaneseq
        %v2130 = vshrl.u32 %v2129, 7
        %v2131 = vsub.s32 0, %v2130
        %v2132 = vrot.slane %v2077, %v2131
        %v2134 = vadd.f32 %v2125, %v2132
        %v2135 = vadd.f32 %v2126, %v2132
        %v2136 = vadd.f32 %v2127, %v2132
        %v2137 = vld [vmem:[%s11] sm:$0xff]
        %v2138 = vld [vmem:[%s11 + $0x8] sm:$0xff]
        %v2139 = vld [vmem:[%s11 + $0x10] sm:$0xff]
        %v2140 = vld [vmem:[%s11 + $0x18] sm:$0xff]
        %v2141 = vld [vmem:[%s12] sm:$0x1]
        %v2143 = vlaneseq
        %v2144 = vshrl.u32 %v2143, 7
        %v2145 = vsub.s32 0, %v2144
        %v2146 = vrot.slane %v2141, %v2145
        %v2149 = vsel %vm979, %v2134, 0
        %v2152 = vsel %vm979, %v2135, 0
        %v2155 = vsel %vm979, %v2136, 0
        %2157 = vmatprep.subr.mxu0 0.0
        %2158 = vmatpush1.msra.mxu0 0.0
        %2159 = vmatprep.subr.mxu0 0.0
        %2160 = vmatpush1.msra.mxu0 0.0
        %2161 = vmatprep.subr.mxu0 0.0
        %2162 = vmatpush1.msra.mxu0 0.0
        %2163 = vmatprep.subr.mxu0 0.0
        %2164 = vmatpush1.msra.mxu0 0.0
        %2165 = vmatprep.subr.mxu0 0.0
        %2166 = vmatpush1.msra.mxu0 0.0
        %2167 = vmatprep.subr.mxu0 0.0
        %2168 = vmatpush1.msra.mxu0 0.0
        %2169 = vmatprep.subr.mxu0 0.0
        %2170 = vmatpush1.msra.mxu0 0.0
        %2171 = vmatprep.subr.mxu0 0.0
        %2172 = vmatpush1.msra.mxu0 0.0
        %2173 = vmatprep.subr.mxu0 0.0
        %2174 = vmatpush1.msra.mxu0 0.0
        %2175 = vmatprep.subr.mxu0 0.0
        %2176 = vmatpush1.msra.mxu0 0.0
        %2177 = vmatprep.subr.mxu0 0.0
        %2178 = vmatpush1.msra.mxu0 0.0
        %2179 = vmatprep.subr.mxu0 0.0
        %2180 = vmatpush1.msra.mxu0 0.0
        %2181 = vmatprep.subr.mxu0 0.0
        %2182 = vmatpush1.msra.mxu0 %v2140
        %2183 = vmatprep.subr.mxu0 0.0
        %2184 = vmatpush1.msra.mxu0 %v2139
        %2185 = vmatprep.subr.mxu0 0.0
        %2186 = vmatpush1.msra.mxu0 %v2138
        %2187 = vmatprep.subr.mxu0 0.0
        %2188 = vmatpush1.msra.mxu0 %v2137
        %2189 = vmatprep.subr.mxu0 0.0
        %2190 = vmatpush2.msra.mxu0 0.0
        %2191 = vmatprep.subr.mxu0 0.0
        %2192 = vmatpush2.msra.mxu0 0.0
        %2193 = vmatprep.subr.mxu0 0.0
        %2194 = vmatpush2.msra.mxu0 0.0
        %2195 = vmatprep.subr.mxu0 0.0
        %2196 = vmatpush2.msra.mxu0 0.0
        %2197 = vmatprep.subr.mxu0 0.0
        %2198 = vmatpush2.msra.mxu0 0.0
        %2199 = vmatprep.subr.mxu0 0.0
        %2200 = vmatpush2.msra.mxu0 0.0
        %2201 = vmatprep.subr.mxu0 0.0
        %2202 = vmatpush2.msra.mxu0 0.0
        %2203 = vmatprep.subr.mxu0 0.0
        %2204 = vmatpush2.msra.mxu0 0.0
        %2205 = vmatprep.subr.mxu0 0.0
        %2206 = vmatpush2.msra.mxu0 0.0
        %2207 = vmatprep.subr.mxu0 0.0
        %2208 = vmatpush2.msra.mxu0 0.0
        %2209 = vmatprep.subr.mxu0 0.0
        %2210 = vmatpush2.msra.mxu0 0.0
        %2211 = vmatprep.subr.mxu0 0.0
        %2212 = vmatpush2.msra.mxu0 0.0
        %2213 = vmatprep.subr.mxu0 0.0
        %2214 = vmatpush2.msra.mxu0 0.0
        %2215 = vmatprep.subr.mxu0 0.0
        %2216 = vmatpush2.msra.mxu0 0.0
        %2217 = vmatprep.subr.mxu0 0.0
        %2218 = vmatpush2.msra.mxu0 0.0
        %2219 = vmatprep.subr.mxu0 0.0
        %2220 = vmatpush2.msra.mxu0 0.0
        %2221 = vmatprep.mubr.f32.mxu0 0.0
        %2222 = vmatmul.mubr.f32.gmra.mxu0 %v2149
        %v2223 = vpop.f32.mrf.mxu0
        %v2224 = vadd.f32 %v2146, %v2223
        %v2225 = vpop.f32.mrf.mxu0
        %2226 = vmatprep.mubr.f32.mxu0 0.0
        %2227 = vmatmul.mubr.f32.gmra.mxu0 %v2152
        %v2228 = vpop.f32.mrf.mxu0
        %v2229 = vadd.f32 %v2146, %v2228
        %v2230 = vpop.f32.mrf.mxu0
        %2231 = vmatprep.mubr.f32.mxu0 0.0
        %2232 = vmatmul.mubr.f32.gmra.mxu0 %v2155
        %v2233 = vpop.f32.mrf.mxu0
        %v2234 = vadd.f32 %v2146, %v2233
        %v2235 = vpop.f32.mrf.mxu0
        %2236 = vdwg.mxu0
        %2237 = vst.msk [vmem:[%s484] sm:$0xff] %vm979, %v2224
        %2238 = vst.msk [vmem:[%s484 + $0x8] sm:$0xff] %vm979, %v2229
        %2239 = vst.msk [vmem:[%s484 + $0x10] sm:$0x7] %vm2084, %v2234
        %p2240 = scmp.lt.s32.totalorder %s26, 1
        %s2241 = scalar_select %p2240, %s26, 1
        %s2242 = smul.addr %s2241, 3
        %s2243 = smul.addr %s2242, 8
        %s2244 = scalar_lea.vmem %s13, %s2243
        // Predicated region
        $region85: #{tpu_custom_call.1} parent=71 // pred_check
          %p2245 = pneg %p322
        $region86: #{tpu_custom_call.1} parent=71 // pred_check_branch
          %2247 = sbr.rel (%p2245) target = $region88
        $region87: #{tpu_custom_call.1} parent=71 // pred_region
          _
        $region88: #{tpu_custom_call.1} parent=71 // pred_fallthru
          _
      $region72: #{tpu_custom_call.1} parent=5 // pred_fallthru
        _
      %p2248 = scmp.le.s32.totalorder 2, %s21
      // Predicated region
      $region89: #{tpu_custom_call.1} parent=5 // pred_check
        %p2249 = pneg %p2248
      $region90: #{tpu_custom_call.1} parent=5 // pred_check_branch
        %2251 = sbr.rel (%p2249) target = $region92
      $region91: #{tpu_custom_call.1} parent=5 // pred_region
        %s2252 = ssub.s32 %s21, 2
        // Predicated region
        $region93: #{tpu_custom_call.1} parent=91 // pred_check
          %p2253 = pneg %p328
        $region94: #{tpu_custom_call.1} parent=91 // pred_check_branch
          %2255 = sbr.rel (%p2253) target = $region96
        $region95: #{tpu_custom_call.1} parent=91 // pred_region
          %p2256 = scmp.lt.s32.totalorder %s27, 1
          %s2257 = scalar_select %p2256, %s27, 1
          %s2258 = smul.addr %s2257, 3
          %s2259 = smul.addr %s2258, 8
          %s2260 = scalar_lea.vmem %s13, %s2259
        $region96: #{tpu_custom_call.1} parent=91 // pred_fallthru
          _
      $region92: #{tpu_custom_call.1} parent=5 // pred_fallthru
        _
    $region6: #{tpu_custom_call.1} parent=1 // loop_footer
      %s25 = sadd.s32 1, %s21
    $region7: #{tpu_custom_call.1} parent=1 // loop_footer_branch
      %20 = sbr.rel target = $region3
    $region8: #{tpu_custom_call.1} parent=1 // loop_exit
      _
    %2261 = vsyncpa [#allocation3], 1
    %s2262 = scalar_lea.sflag [#allocation3], 1
    %2263 = vsyncpa %s2262, 1
    %2264 = vsyncpa [#allocation5], 1

</llo_original>
